<compile_context>
chip_gen: v5e
topology: v5e:2x2
jax: 0.10.0
libtpu: 0.0.40
codegen_flags: <defaults>
</compile_context>

<pallas_src>
import jax
import jax.numpy as jnp
from jax import lax
from jax.experimental import pallas as pl
from jax.experimental.pallas import tpu as pltpu

# VICReg default coefficients
SIM_COEFF = 25.0
STD_COEFF = 25.0
COV_COEFF = 1.0
BN_EPS = 1e-5


# ----------------------------------------------------------------------------
# Fused kernel: projector(backbone(x)), projector(backbone(y)), VICReg loss
# ----------------------------------------------------------------------------
def vicreg_kernel(x_ref, y_ref, wb_ref, bb_ref, w1_ref, b1_ref, g_ref, be_ref,
                  w2_ref, loss_ref):
    B = x_ref.shape[0]
    F = w2_ref.shape[1]
    inv_bm1 = 1.0 / (B - 1)

    # Weights / params are VMEM-resident for the single grid step.
    wb = wb_ref[...]
    bb = bb_ref[...]
    w1 = w1_ref[...]
    b1 = b1_ref[...]
    gamma = g_ref[...]
    beta = be_ref[...]
    w2 = w2_ref[...]

    def branch(xin):
        # Backbone stand-in: flatten + Linear (bf16 MXU operands, f32 accum).
        emb = jnp.dot(xin.astype(jnp.bfloat16), wb,
                      preferred_element_type=jnp.float32) + bb        # (B, E)
        # Projector hidden Linear.
        h = jnp.dot(emb.astype(jnp.bfloat16), w1,
                    preferred_element_type=jnp.float32) + b1          # (B, H)
        # BatchNorm1d (training mode: biased batch variance), f32, then ReLU.
        mu = jnp.mean(h, axis=0, keepdims=True)
        var = jnp.mean((h - mu) * (h - mu), axis=0, keepdims=True)
        hr = jnp.maximum(
            (h - mu) * lax.rsqrt(var + BN_EPS) * gamma + beta, 0.0)   # (B, H)
        # Final projector Linear (no bias).
        z = jnp.dot(hr.astype(jnp.bfloat16), w2,
                    preferred_element_type=jnp.float32)               # (B, F)
        return z

    zx = branch(x_ref[...])
    zy = branch(y_ref[...])

    # Representation loss (MSE on the projector outputs, pre-centering).
    diff = zx - zy
    repr_loss = jnp.mean(diff * diff)

    def branch_stats(z):
        # Center per branch (f32).
        zc = z - jnp.mean(z, axis=0, keepdims=True)                   # (B, F)
        # Unbiased variance = diag(cov); keep 2-D lane-dense shape.
        var = jnp.sum(zc * zc, axis=0, keepdims=True) * inv_bm1       # (1, F)
        std = jnp.sqrt(var + 1e-4)
        std_term = jnp.mean(jnp.maximum(1.0 - std, 0.0))
        # Gram trick: ||cov||_F^2 = inv_bm1^2 * ||Zc Zc^T||_F^2, contraction
        # over the feature axis -> (B, B) instead of an (F, F) matmul.
        gram = lax.dot_general(zc, zc, (((1,), (1,)), ((), ())),
                               preferred_element_type=jnp.float32)    # (B, B)
        sum_cov_sq = jnp.sum(gram * gram) * (inv_bm1 * inv_bm1)
        # Off-diagonal-only sum of squares = total - diagonal (= var^2).
        cov_term = (sum_cov_sq - jnp.sum(var * var)) / F
        return std_term, cov_term

    std_x, cov_x = branch_stats(zx)
    std_y, cov_y = branch_stats(zy)

    std_loss = 0.5 * std_x + 0.5 * std_y
    cov_loss = cov_x + cov_y

    loss_ref[0] = (SIM_COEFF * repr_loss +
                   STD_COEFF * std_loss +
                   COV_COEFF * cov_loss)


# ----------------------------------------------------------------------------
# VICReg forward wrapper
# ----------------------------------------------------------------------------
def vicreg_forward(x_img, y_img, params):
    wb, bb, w1, b1, gamma, beta, w2 = params
    B = x_img.shape[0]
    assert B >= 2, "VICReg needs batch >= 2 (unbiased variance / BN stats)"
    D, E = wb.shape
    H = w1.shape[1]
    F = w2.shape[1]

    # Row-major flatten of contiguous NCHW is free (no HBM slab is written).
    xf = x_img.reshape(B, D)
    yf = y_img.reshape(B, D)

    # bf16 weights for the MXU (halves weight DMA); bias/BN params stay f32.
    wb_b = wb.astype(jnp.bfloat16)
    w1_b = w1.astype(jnp.bfloat16)
    w2_b = w2.astype(jnp.bfloat16)

    loss = pl.pallas_call(
        vicreg_kernel,
        out_shape=jax.ShapeDtypeStruct((1,), jnp.float32),
        grid_spec=pltpu.PrefetchScalarGridSpec(
            num_scalar_prefetch=0,
            grid=(1,),                                     # single invocation
            in_specs=[
                pl.BlockSpec((B, D), lambda k: (0, 0)),    # view x (f32)
                pl.BlockSpec((B, D), lambda k: (0, 0)),    # view y (f32)
                pl.BlockSpec((D, E), lambda k: (0, 0)),    # backbone W (bf16)
                pl.BlockSpec((1, E), lambda k: (0, 0)),    # backbone bias
                pl.BlockSpec((E, H), lambda k: (0, 0)),    # proj W1 (bf16)
                pl.BlockSpec((1, H), lambda k: (0, 0)),    # proj b1
                pl.BlockSpec((1, H), lambda k: (0, 0)),    # BN gamma
                pl.BlockSpec((1, H), lambda k: (0, 0)),    # BN beta
                pl.BlockSpec((H, F), lambda k: (0, 0)),    # proj W2 (bf16)
            ],
            out_specs=pl.BlockSpec(memory_space=pltpu.SMEM),
        ),
        compiler_params=pltpu.CompilerParams(
            dimension_semantics=("arbitrary",),
        ),
    )(xf, yf, wb_b, bb, w1_b, b1, gamma, beta, w2_b)
    return loss[0]


def init_params(key, D, E, H, F):
    ks = jax.random.split(key, 3)
    wb = jax.random.normal(ks[0], (D, E), jnp.float32) * (1.0 / jnp.sqrt(D))
    bb = jnp.zeros((1, E), jnp.float32)
    w1 = jax.random.normal(ks[1], (E, H), jnp.float32) * (1.0 / jnp.sqrt(E))
    b1 = jnp.zeros((1, H), jnp.float32)
    gamma = jnp.ones((1, H), jnp.float32)
    beta = jnp.zeros((1, H), jnp.float32)
    w2 = jax.random.normal(ks[2], (H, F), jnp.float32) * (1.0 / jnp.sqrt(H))
    return (wb, bb, w1, b1, gamma, beta, w2)


if __name__ == "__main__":
    # small but lane-dense shapes: batch=8, channels=4, spatial=16x16
    # embedding / projector mlp "128-128" -> num_features = 128
    B, C, Himg, Wimg = 8, 4, 16, 16
    D = C * Himg * Wimg               # 1024 flattened pixels
    E, Hh, F = 128, 128, 128          # multiples of 128 (full vreg lanes)

    key = jax.random.PRNGKey(0)
    kx, ky, kp = jax.random.split(key, 3)
    x_img = jax.random.normal(kx, (B, C, Himg, Wimg), jnp.float32)
    y_img = x_img + 0.1 * jax.random.normal(ky, (B, C, Himg, Wimg), jnp.float32)
    params = init_params(kp, D, E, Hh, F)

    loss = jax.jit(vicreg_forward)(x_img, y_img, params)
    jax.block_until_ready(loss)
    assert jnp.isfinite(loss)
    print("KERNEL_OK")
</pallas_src>

<mosaic_0001>
module attributes {stable_mosaic.version = 11 : i64} {
  func.func @vicreg_kernel(%arg0: i32, %arg1: memref<8x1024xf32, #tpu.memory_space<vmem>>, %arg2: memref<8x1024xf32, #tpu.memory_space<vmem>>, %arg3: memref<1024x128xbf16, #tpu.memory_space<vmem>>, %arg4: memref<1x128xf32, #tpu.memory_space<vmem>>, %arg5: memref<128x128xbf16, #tpu.memory_space<vmem>>, %arg6: memref<1x128xf32, #tpu.memory_space<vmem>>, %arg7: memref<1x128xf32, #tpu.memory_space<vmem>>, %arg8: memref<1x128xf32, #tpu.memory_space<vmem>>, %arg9: memref<128x128xbf16, #tpu.memory_space<vmem>>, %arg10: memref<1xf32, #tpu.memory_space<smem>>) attributes {dimension_semantics = [#tpu.dimension_semantics<arbitrary>], iteration_bounds = array<i64: 1>, scalar_prefetch = 0 : i64, scratch_operands = 0 : i64, tpu.core_type = #tpu.core_type<tc>, window_params = [{pipeline_mode = #tpu.pipeline_mode<synchronous>, transform_indices = @transform_0, window_bounds = array<i64: 8, 1024>}, {pipeline_mode = #tpu.pipeline_mode<synchronous>, transform_indices = @transform_1, window_bounds = array<i64: 8, 1024>}, {pipeline_mode = #tpu.pipeline_mode<synchronous>, transform_indices = @transform_2, window_bounds = array<i64: 1024, 128>}, {pipeline_mode = #tpu.pipeline_mode<synchronous>, transform_indices = @transform_3, window_bounds = array<i64: 1, 128>}, {pipeline_mode = #tpu.pipeline_mode<synchronous>, transform_indices = @transform_4, window_bounds = array<i64: 128, 128>}, {pipeline_mode = #tpu.pipeline_mode<synchronous>, transform_indices = @transform_5, window_bounds = array<i64: 1, 128>}, {pipeline_mode = #tpu.pipeline_mode<synchronous>, transform_indices = @transform_6, window_bounds = array<i64: 1, 128>}, {pipeline_mode = #tpu.pipeline_mode<synchronous>, transform_indices = @transform_7, window_bounds = array<i64: 1, 128>}, {pipeline_mode = #tpu.pipeline_mode<synchronous>, transform_indices = @transform_8, window_bounds = array<i64: 128, 128>}, {transform_indices = @transform_9, window_bounds = array<i64: 1>}]} {
    %c0 = arith.constant 0 : index
    %c0_0 = arith.constant 0 : index
    %0 = vector.load %arg3[%c0, %c0_0] : memref<1024x128xbf16, #tpu.memory_space<vmem>>, vector<1024x128xbf16>
    %c0_1 = arith.constant 0 : index
    %c0_2 = arith.constant 0 : index
    %1 = vector.load %arg4[%c0_1, %c0_2] : memref<1x128xf32, #tpu.memory_space<vmem>>, vector<1x128xf32>
    %c0_3 = arith.constant 0 : index
    %c0_4 = arith.constant 0 : index
    %2 = vector.load %arg5[%c0_3, %c0_4] : memref<128x128xbf16, #tpu.memory_space<vmem>>, vector<128x128xbf16>
    %c0_5 = arith.constant 0 : index
    %c0_6 = arith.constant 0 : index
    %3 = vector.load %arg6[%c0_5, %c0_6] : memref<1x128xf32, #tpu.memory_space<vmem>>, vector<1x128xf32>
    %c0_7 = arith.constant 0 : index
    %c0_8 = arith.constant 0 : index
    %4 = vector.load %arg7[%c0_7, %c0_8] : memref<1x128xf32, #tpu.memory_space<vmem>>, vector<1x128xf32>
    %c0_9 = arith.constant 0 : index
    %c0_10 = arith.constant 0 : index
    %5 = vector.load %arg8[%c0_9, %c0_10] : memref<1x128xf32, #tpu.memory_space<vmem>>, vector<1x128xf32>
    %c0_11 = arith.constant 0 : index
    %c0_12 = arith.constant 0 : index
    %6 = vector.load %arg9[%c0_11, %c0_12] : memref<128x128xbf16, #tpu.memory_space<vmem>>, vector<128x128xbf16>
    %c0_13 = arith.constant 0 : index
    %c0_14 = arith.constant 0 : index
    %7 = vector.load %arg1[%c0_13, %c0_14] : memref<8x1024xf32, #tpu.memory_space<vmem>>, vector<8x1024xf32>
    %8 = arith.truncf %7 : vector<8x1024xf32> to vector<8x1024xbf16>
    %cst = arith.constant dense<0.000000e+00> : vector<8x128xf32>
    %9 = tpu.matmul %8, %0, %cst {dimension_numbers = #tpu.dot_dimension_numbers<[1], [0], [0], [1], [0, 0, 1, 1], [], []>} : vector<8x1024xbf16>, vector<1024x128xbf16>, vector<8x128xf32> -> vector<8x128xf32>
    %10 = vector.broadcast %1 : vector<1x128xf32> to vector<8x128xf32>
    %11 = arith.addf %9, %10 : vector<8x128xf32>
    %12 = arith.truncf %11 : vector<8x128xf32> to vector<8x128xbf16>
    %cst_15 = arith.constant dense<0.000000e+00> : vector<8x128xf32>
    %13 = tpu.matmul %12, %2, %cst_15 {dimension_numbers = #tpu.dot_dimension_numbers<[1], [0], [0], [1], [0, 0, 1, 1], [], []>} : vector<8x128xbf16>, vector<128x128xbf16>, vector<8x128xf32> -> vector<8x128xf32>
    %14 = vector.broadcast %3 : vector<1x128xf32> to vector<8x128xf32>
    %15 = arith.addf %13, %14 : vector<8x128xf32>
    %cst_16 = arith.constant dense<0.000000e+00> : vector<128xf32>
    %16 = vector.multi_reduction <add>, %15, %cst_16 [0] : vector<8x128xf32> to vector<128xf32>
    %17 = vector.shape_cast %16 : vector<128xf32> to vector<1x128xf32>
    %cst_17 = arith.constant 8.000000e+00 : f32
    %18 = vector.broadcast %cst_17 : f32 to vector<1x128xf32>
    %19 = arith.divf %17, %18 : vector<1x128xf32>
    %20 = vector.broadcast %19 : vector<1x128xf32> to vector<8x128xf32>
    %21 = arith.subf %15, %20 : vector<8x128xf32>
    %22 = vector.broadcast %19 : vector<1x128xf32> to vector<8x128xf32>
    %23 = arith.subf %15, %22 : vector<8x128xf32>
    %24 = arith.mulf %21, %23 : vector<8x128xf32>
    %cst_18 = arith.constant dense<0.000000e+00> : vector<128xf32>
    %25 = vector.multi_reduction <add>, %24, %cst_18 [0] : vector<8x128xf32> to vector<128xf32>
    %26 = vector.shape_cast %25 : vector<128xf32> to vector<1x128xf32>
    %cst_19 = arith.constant 8.000000e+00 : f32
    %27 = vector.broadcast %cst_19 : f32 to vector<1x128xf32>
    %28 = arith.divf %26, %27 : vector<1x128xf32>
    %29 = vector.broadcast %19 : vector<1x128xf32> to vector<8x128xf32>
    %30 = arith.subf %15, %29 : vector<8x128xf32>
    %cst_20 = arith.constant 9.99999974E-6 : f32
    %31 = vector.broadcast %cst_20 : f32 to vector<1x128xf32>
    %32 = arith.addf %28, %31 : vector<1x128xf32>
    %33 = math.rsqrt %32 : vector<1x128xf32>
    %34 = vector.broadcast %33 : vector<1x128xf32> to vector<8x128xf32>
    %35 = arith.mulf %30, %34 : vector<8x128xf32>
    %36 = vector.broadcast %4 : vector<1x128xf32> to vector<8x128xf32>
    %37 = arith.mulf %35, %36 : vector<8x128xf32>
    %38 = vector.broadcast %5 : vector<1x128xf32> to vector<8x128xf32>
    %39 = arith.addf %37, %38 : vector<8x128xf32>
    %cst_21 = arith.constant 0.000000e+00 : f32
    %40 = vector.broadcast %cst_21 : f32 to vector<8x128xf32>
    %41 = arith.maximumf %39, %40 : vector<8x128xf32>
    %42 = arith.truncf %41 : vector<8x128xf32> to vector<8x128xbf16>
    %cst_22 = arith.constant dense<0.000000e+00> : vector<8x128xf32>
    %43 = tpu.matmul %42, %6, %cst_22 {dimension_numbers = #tpu.dot_dimension_numbers<[1], [0], [0], [1], [0, 0, 1, 1], [], []>} : vector<8x128xbf16>, vector<128x128xbf16>, vector<8x128xf32> -> vector<8x128xf32>
    %c0_23 = arith.constant 0 : index
    %c0_24 = arith.constant 0 : index
    %44 = vector.load %arg2[%c0_23, %c0_24] : memref<8x1024xf32, #tpu.memory_space<vmem>>, vector<8x1024xf32>
    %45 = arith.truncf %44 : vector<8x1024xf32> to vector<8x1024xbf16>
    %cst_25 = arith.constant dense<0.000000e+00> : vector<8x128xf32>
    %46 = tpu.matmul %45, %0, %cst_25 {dimension_numbers = #tpu.dot_dimension_numbers<[1], [0], [0], [1], [0, 0, 1, 1], [], []>} : vector<8x1024xbf16>, vector<1024x128xbf16>, vector<8x128xf32> -> vector<8x128xf32>
    %47 = vector.broadcast %1 : vector<1x128xf32> to vector<8x128xf32>
    %48 = arith.addf %46, %47 : vector<8x128xf32>
    %49 = arith.truncf %48 : vector<8x128xf32> to vector<8x128xbf16>
    %cst_26 = arith.constant dense<0.000000e+00> : vector<8x128xf32>
    %50 = tpu.matmul %49, %2, %cst_26 {dimension_numbers = #tpu.dot_dimension_numbers<[1], [0], [0], [1], [0, 0, 1, 1], [], []>} : vector<8x128xbf16>, vector<128x128xbf16>, vector<8x128xf32> -> vector<8x128xf32>
    %51 = vector.broadcast %3 : vector<1x128xf32> to vector<8x128xf32>
    %52 = arith.addf %50, %51 : vector<8x128xf32>
    %cst_27 = arith.constant dense<0.000000e+00> : vector<128xf32>
    %53 = vector.multi_reduction <add>, %52, %cst_27 [0] : vector<8x128xf32> to vector<128xf32>
    %54 = vector.shape_cast %53 : vector<128xf32> to vector<1x128xf32>
    %cst_28 = arith.constant 8.000000e+00 : f32
    %55 = vector.broadcast %cst_28 : f32 to vector<1x128xf32>
    %56 = arith.divf %54, %55 : vector<1x128xf32>
    %57 = vector.broadcast %56 : vector<1x128xf32> to vector<8x128xf32>
    %58 = arith.subf %52, %57 : vector<8x128xf32>
    %59 = vector.broadcast %56 : vector<1x128xf32> to vector<8x128xf32>
    %60 = arith.subf %52, %59 : vector<8x128xf32>
    %61 = arith.mulf %58, %60 : vector<8x128xf32>
    %cst_29 = arith.constant dense<0.000000e+00> : vector<128xf32>
    %62 = vector.multi_reduction <add>, %61, %cst_29 [0] : vector<8x128xf32> to vector<128xf32>
    %63 = vector.shape_cast %62 : vector<128xf32> to vector<1x128xf32>
    %cst_30 = arith.constant 8.000000e+00 : f32
    %64 = vector.broadcast %cst_30 : f32 to vector<1x128xf32>
    %65 = arith.divf %63, %64 : vector<1x128xf32>
    %66 = vector.broadcast %56 : vector<1x128xf32> to vector<8x128xf32>
    %67 = arith.subf %52, %66 : vector<8x128xf32>
    %cst_31 = arith.constant 9.99999974E-6 : f32
    %68 = vector.broadcast %cst_31 : f32 to vector<1x128xf32>
    %69 = arith.addf %65, %68 : vector<1x128xf32>
    %70 = math.rsqrt %69 : vector<1x128xf32>
    %71 = vector.broadcast %70 : vector<1x128xf32> to vector<8x128xf32>
    %72 = arith.mulf %67, %71 : vector<8x128xf32>
    %73 = vector.broadcast %4 : vector<1x128xf32> to vector<8x128xf32>
    %74 = arith.mulf %72, %73 : vector<8x128xf32>
    %75 = vector.broadcast %5 : vector<1x128xf32> to vector<8x128xf32>
    %76 = arith.addf %74, %75 : vector<8x128xf32>
    %cst_32 = arith.constant 0.000000e+00 : f32
    %77 = vector.broadcast %cst_32 : f32 to vector<8x128xf32>
    %78 = arith.maximumf %76, %77 : vector<8x128xf32>
    %79 = arith.truncf %78 : vector<8x128xf32> to vector<8x128xbf16>
    %cst_33 = arith.constant dense<0.000000e+00> : vector<8x128xf32>
    %80 = tpu.matmul %79, %6, %cst_33 {dimension_numbers = #tpu.dot_dimension_numbers<[1], [0], [0], [1], [0, 0, 1, 1], [], []>} : vector<8x128xbf16>, vector<128x128xbf16>, vector<8x128xf32> -> vector<8x128xf32>
    %81 = arith.subf %43, %80 : vector<8x128xf32>
    %82 = arith.mulf %81, %81 : vector<8x128xf32>
    %83 = vector.shape_cast %82 : vector<8x128xf32> to vector<1x8x128xf32>
    %cst_34 = arith.constant dense<0.000000e+00> : vector<1xf32>
    %84 = vector.multi_reduction <add>, %83, %cst_34 [1, 2] : vector<1x8x128xf32> to vector<1xf32>
    %85 = vector.shape_cast %84 : vector<1xf32> to vector<1x1x1xf32>
    %86 = vector.extract %85[0, 0, 0] : f32 from vector<1x1x1xf32>
    %cst_35 = arith.constant 1.024000e+03 : f32
    %87 = arith.divf %86, %cst_35 : f32
    %cst_36 = arith.constant dense<0.000000e+00> : vector<128xf32>
    %88 = vector.multi_reduction <add>, %43, %cst_36 [0] : vector<8x128xf32> to vector<128xf32>
    %89 = vector.shape_cast %88 : vector<128xf32> to vector<1x128xf32>
    %cst_37 = arith.constant 8.000000e+00 : f32
    %90 = vector.broadcast %cst_37 : f32 to vector<1x128xf32>
    %91 = arith.divf %89, %90 : vector<1x128xf32>
    %92 = vector.broadcast %91 : vector<1x128xf32> to vector<8x128xf32>
    %93 = arith.subf %43, %92 : vector<8x128xf32>
    %94 = arith.mulf %93, %93 : vector<8x128xf32>
    %cst_38 = arith.constant dense<0.000000e+00> : vector<128xf32>
    %95 = vector.multi_reduction <add>, %94, %cst_38 [0] : vector<8x128xf32> to vector<128xf32>
    %96 = vector.shape_cast %95 : vector<128xf32> to vector<1x128xf32>
    %cst_39 = arith.constant 0.142857149 : f32
    %97 = vector.broadcast %cst_39 : f32 to vector<1x128xf32>
    %98 = arith.mulf %96, %97 : vector<1x128xf32>
    %cst_40 = arith.constant 9.99999974E-5 : f32
    %99 = vector.broadcast %cst_40 : f32 to vector<1x128xf32>
    %100 = arith.addf %98, %99 : vector<1x128xf32>
    %101 = math.sqrt %100 : vector<1x128xf32>
    %cst_41 = arith.constant 1.000000e+00 : f32
    %102 = vector.broadcast %cst_41 : f32 to vector<1x128xf32>
    %103 = arith.subf %102, %101 : vector<1x128xf32>
    %cst_42 = arith.constant 0.000000e+00 : f32
    %104 = vector.broadcast %cst_42 : f32 to vector<1x128xf32>
    %105 = arith.maximumf %103, %104 : vector<1x128xf32>
    %106 = vector.shape_cast %105 : vector<1x128xf32> to vector<1x1x128xf32>
    %cst_43 = arith.constant dense<0.000000e+00> : vector<1xf32>
    %107 = vector.multi_reduction <add>, %106, %cst_43 [1, 2] : vector<1x1x128xf32> to vector<1xf32>
    %108 = vector.shape_cast %107 : vector<1xf32> to vector<1x1x1xf32>
    %109 = vector.extract %108[0, 0, 0] : f32 from vector<1x1x1xf32>
    %cst_44 = arith.constant 1.280000e+02 : f32
    %110 = arith.divf %109, %cst_44 : f32
    %cst_45 = arith.constant dense<0.000000e+00> : vector<8x8xf32>
    %111 = tpu.matmul %93, %93, %cst_45 {dimension_numbers = #tpu.dot_dimension_numbers<[1], [1], [0], [0], [0, 0, 1, 0], [], []>} : vector<8x128xf32>, vector<8x128xf32>, vector<8x8xf32> -> vector<8x8xf32>
    %112 = arith.mulf %111, %111 : vector<8x8xf32>
    %113 = vector.shape_cast %112 : vector<8x8xf32> to vector<1x8x8xf32>
    %cst_46 = arith.constant dense<0.000000e+00> : vector<1xf32>
    %114 = vector.multi_reduction <add>, %113, %cst_46 [1, 2] : vector<1x8x8xf32> to vector<1xf32>
    %115 = vector.shape_cast %114 : vector<1xf32> to vector<1x1x1xf32>
    %116 = vector.extract %115[0, 0, 0] : f32 from vector<1x1x1xf32>
    %cst_47 = arith.constant 0.0204081628 : f32
    %117 = arith.mulf %116, %cst_47 : f32
    %118 = arith.mulf %98, %98 : vector<1x128xf32>
    %119 = vector.shape_cast %118 : vector<1x128xf32> to vector<1x1x128xf32>
    %cst_48 = arith.constant dense<0.000000e+00> : vector<1xf32>
    %120 = vector.multi_reduction <add>, %119, %cst_48 [1, 2] : vector<1x1x128xf32> to vector<1xf32>
    %121 = vector.shape_cast %120 : vector<1xf32> to vector<1x1x1xf32>
    %122 = vector.extract %121[0, 0, 0] : f32 from vector<1x1x1xf32>
    %123 = arith.subf %117, %122 : f32
    %cst_49 = arith.constant 1.280000e+02 : f32
    %124 = arith.divf %123, %cst_49 : f32
    %cst_50 = arith.constant dense<0.000000e+00> : vector<128xf32>
    %125 = vector.multi_reduction <add>, %80, %cst_50 [0] : vector<8x128xf32> to vector<128xf32>
    %126 = vector.shape_cast %125 : vector<128xf32> to vector<1x128xf32>
    %cst_51 = arith.constant 8.000000e+00 : f32
    %127 = vector.broadcast %cst_51 : f32 to vector<1x128xf32>
    %128 = arith.divf %126, %127 : vector<1x128xf32>
    %129 = vector.broadcast %128 : vector<1x128xf32> to vector<8x128xf32>
    %130 = arith.subf %80, %129 : vector<8x128xf32>
    %131 = arith.mulf %130, %130 : vector<8x128xf32>
    %cst_52 = arith.constant dense<0.000000e+00> : vector<128xf32>
    %132 = vector.multi_reduction <add>, %131, %cst_52 [0] : vector<8x128xf32> to vector<128xf32>
    %133 = vector.shape_cast %132 : vector<128xf32> to vector<1x128xf32>
    %cst_53 = arith.constant 0.142857149 : f32
    %134 = vector.broadcast %cst_53 : f32 to vector<1x128xf32>
    %135 = arith.mulf %133, %134 : vector<1x128xf32>
    %cst_54 = arith.constant 9.99999974E-5 : f32
    %136 = vector.broadcast %cst_54 : f32 to vector<1x128xf32>
    %137 = arith.addf %135, %136 : vector<1x128xf32>
    %138 = math.sqrt %137 : vector<1x128xf32>
    %cst_55 = arith.constant 1.000000e+00 : f32
    %139 = vector.broadcast %cst_55 : f32 to vector<1x128xf32>
    %140 = arith.subf %139, %138 : vector<1x128xf32>
    %cst_56 = arith.constant 0.000000e+00 : f32
    %141 = vector.broadcast %cst_56 : f32 to vector<1x128xf32>
    %142 = arith.maximumf %140, %141 : vector<1x128xf32>
    %143 = vector.shape_cast %142 : vector<1x128xf32> to vector<1x1x128xf32>
    %cst_57 = arith.constant dense<0.000000e+00> : vector<1xf32>
    %144 = vector.multi_reduction <add>, %143, %cst_57 [1, 2] : vector<1x1x128xf32> to vector<1xf32>
    %145 = vector.shape_cast %144 : vector<1xf32> to vector<1x1x1xf32>
    %146 = vector.extract %145[0, 0, 0] : f32 from vector<1x1x1xf32>
    %cst_58 = arith.constant 1.280000e+02 : f32
    %147 = arith.divf %146, %cst_58 : f32
    %cst_59 = arith.constant dense<0.000000e+00> : vector<8x8xf32>
    %148 = tpu.matmul %130, %130, %cst_59 {dimension_numbers = #tpu.dot_dimension_numbers<[1], [1], [0], [0], [0, 0, 1, 0], [], []>} : vector<8x128xf32>, vector<8x128xf32>, vector<8x8xf32> -> vector<8x8xf32>
    %149 = arith.mulf %148, %148 : vector<8x8xf32>
    %150 = vector.shape_cast %149 : vector<8x8xf32> to vector<1x8x8xf32>
    %cst_60 = arith.constant dense<0.000000e+00> : vector<1xf32>
    %151 = vector.multi_reduction <add>, %150, %cst_60 [1, 2] : vector<1x8x8xf32> to vector<1xf32>
    %152 = vector.shape_cast %151 : vector<1xf32> to vector<1x1x1xf32>
    %153 = vector.extract %152[0, 0, 0] : f32 from vector<1x1x1xf32>
    %cst_61 = arith.constant 0.0204081628 : f32
    %154 = arith.mulf %153, %cst_61 : f32
    %155 = arith.mulf %135, %135 : vector<1x128xf32>
    %156 = vector.shape_cast %155 : vector<1x128xf32> to vector<1x1x128xf32>
    %cst_62 = arith.constant dense<0.000000e+00> : vector<1xf32>
    %157 = vector.multi_reduction <add>, %156, %cst_62 [1, 2] : vector<1x1x128xf32> to vector<1xf32>
    %158 = vector.shape_cast %157 : vector<1xf32> to vector<1x1x1xf32>
    %159 = vector.extract %158[0, 0, 0] : f32 from vector<1x1x1xf32>
    %160 = arith.subf %154, %159 : f32
    %cst_63 = arith.constant 1.280000e+02 : f32
    %161 = arith.divf %160, %cst_63 : f32
    %cst_64 = arith.constant 5.000000e-01 : f32
    %162 = arith.mulf %cst_64, %110 : f32
    %cst_65 = arith.constant 5.000000e-01 : f32
    %163 = arith.mulf %cst_65, %147 : f32
    %164 = arith.addf %162, %163 : f32
    %165 = arith.addf %124, %161 : f32
    %cst_66 = arith.constant 2.500000e+01 : f32
    %166 = arith.mulf %cst_66, %87 : f32
    %cst_67 = arith.constant 2.500000e+01 : f32
    %167 = arith.mulf %cst_67, %164 : f32
    %168 = arith.addf %166, %167 : f32
    %cst_68 = arith.constant 1.000000e+00 : f32
    %169 = arith.mulf %cst_68, %165 : f32
    %170 = arith.addf %168, %169 : f32
    %c0_69 = arith.constant 0 : index
    %171 = memref.load %arg10[%c0_69] : memref<1xf32, #tpu.memory_space<smem>>
    memref.store %170, %arg10[%c0_69] : memref<1xf32, #tpu.memory_space<smem>>
    return
  }
  func.func @transform_0(%arg0: i32) -> (i32, i32) {
    %c0_i32 = arith.constant 0 : i32
    %c0_i32_0 = arith.constant 0 : i32
    %c0_i32_1 = arith.constant 0 : i32
    return %c0_i32, %c0_i32_0 : i32, i32
  }
  func.func @transform_1(%arg0: i32) -> (i32, i32) {
    %c0_i32 = arith.constant 0 : i32
    %c0_i32_0 = arith.constant 0 : i32
    %c0_i32_1 = arith.constant 0 : i32
    return %c0_i32, %c0_i32_0 : i32, i32
  }
  func.func @transform_2(%arg0: i32) -> (i32, i32) {
    %c0_i32 = arith.constant 0 : i32
    %c0_i32_0 = arith.constant 0 : i32
    %c0_i32_1 = arith.constant 0 : i32
    return %c0_i32, %c0_i32_0 : i32, i32
  }
  func.func @transform_3(%arg0: i32) -> (i32, i32) {
    %c0_i32 = arith.constant 0 : i32
    %c0_i32_0 = arith.constant 0 : i32
    %c0_i32_1 = arith.constant 0 : i32
    return %c0_i32, %c0_i32_0 : i32, i32
  }
  func.func @transform_4(%arg0: i32) -> (i32, i32) {
    %c0_i32 = arith.constant 0 : i32
    %c0_i32_0 = arith.constant 0 : i32
    %c0_i32_1 = arith.constant 0 : i32
    return %c0_i32, %c0_i32_0 : i32, i32
  }
  func.func @transform_5(%arg0: i32) -> (i32, i32) {
    %c0_i32 = arith.constant 0 : i32
    %c0_i32_0 = arith.constant 0 : i32
    %c0_i32_1 = arith.constant 0 : i32
    return %c0_i32, %c0_i32_0 : i32, i32
  }
  func.func @transform_6(%arg0: i32) -> (i32, i32) {
    %c0_i32 = arith.constant 0 : i32
    %c0_i32_0 = arith.constant 0 : i32
    %c0_i32_1 = arith.constant 0 : i32
    return %c0_i32, %c0_i32_0 : i32, i32
  }
  func.func @transform_7(%arg0: i32) -> (i32, i32) {
    %c0_i32 = arith.constant 0 : i32
    %c0_i32_0 = arith.constant 0 : i32
    %c0_i32_1 = arith.constant 0 : i32
    return %c0_i32, %c0_i32_0 : i32, i32
  }
  func.func @transform_8(%arg0: i32) -> (i32, i32) {
    %c0_i32 = arith.constant 0 : i32
    %c0_i32_0 = arith.constant 0 : i32
    %c0_i32_1 = arith.constant 0 : i32
    return %c0_i32, %c0_i32_0 : i32, i32
  }
  func.func @transform_9(%arg0: i32) -> i32 {
    %c0_i32 = arith.constant 0 : i32
    %c0_i32_0 = arith.constant 0 : i32
    return %c0_i32 : i32
  }
}

</mosaic_0001>

<llo_original>
// kernel: vicreg_forward.1
$region0: #{vicreg_forward.1}
  #allocation0 [shape = 'u32[]', space=smem, size = 0x4, offset = 0x4, fixed_abs, tag = 'smem constant byte address 0x4 - core index']
  #allocation1 [shape = 'u32[72,128]{1,0:T(1,128)}', space=vmem, size = 0x9000, scoped, tag = 'internal scratch']
  %s0 = inlined_call_operand.vmem [shape: f32[8,1024], index: 0, kind: input, shape index: {}]
  %s1 = inlined_call_operand.vmem [shape: f32[8,1024], index: 1, kind: input, shape index: {}]
  %s2 = inlined_call_operand.vmem [shape: bf16[1024,128], index: 2, kind: input, shape index: {}]
  %s3 = inlined_call_operand.vmem [shape: f32[1,128], index: 3, kind: input, shape index: {}]
  %s4 = inlined_call_operand.vmem [shape: bf16[128,128], index: 4, kind: input, shape index: {}]
  %s5 = inlined_call_operand.vmem [shape: f32[1,128], index: 5, kind: input, shape index: {}]
  %s6 = inlined_call_operand.vmem [shape: f32[1,128], index: 6, kind: input, shape index: {}]
  %s7 = inlined_call_operand.vmem [shape: f32[1,128], index: 7, kind: input, shape index: {}]
  %s8 = inlined_call_operand.vmem [shape: bf16[128,128], index: 8, kind: input, shape index: {}]
  %s9 = inlined_call_operand.hbm [shape: f32[1], index: 9, kind: output, shape index: {}]
  %s10 = sld [smem:[#allocation0]]
  $region46: #{vicreg_forward.1} parent=0
    _
  %s12 = ssub.s32 1, %s10
  %s13 = scalar_select 0, %s12, %s10
  $region1: #{vicreg_forward.1} parent=0
    #allocation2 [shape = 'u8[512]{0}', space=smem, size = 0x200, scoped, tag = 'output window, operand 0, single buffered']
    #allocation3 [shape = 's32[1]{0}', space=sflag, size = 0x4, scoped, tag = 'scoped memory for vicreg_forward.1']
    %14 = vsyncpa [#allocation3], 0
    // Predicated region
    $region2: #{vicreg_forward.1} parent=1 // pred_check
      _
    $region3: #{vicreg_forward.1} parent=1 // pred_check_branch
      %16 = sbr.rel (0) target = $region5
    $region4: #{vicreg_forward.1} parent=1 // pred_region
      _
    $region5: #{vicreg_forward.1} parent=1 // pred_fallthru
      _
    // Predicated region
    $region6: #{vicreg_forward.1} parent=1 // pred_check
      _
    $region7: #{vicreg_forward.1} parent=1 // pred_check_branch
      %18 = sbr.rel (0) target = $region9
    $region8: #{vicreg_forward.1} parent=1 // pred_region
      _
    $region9: #{vicreg_forward.1} parent=1 // pred_fallthru
      _
    // Predicated region
    $region10: #{vicreg_forward.1} parent=1 // pred_check
      _
    $region11: #{vicreg_forward.1} parent=1 // pred_check_branch
      %20 = sbr.rel (0) target = $region13
    $region12: #{vicreg_forward.1} parent=1 // pred_region
      _
    $region13: #{vicreg_forward.1} parent=1 // pred_fallthru
      _
    // Predicated region
    $region14: #{vicreg_forward.1} parent=1 // pred_check
      _
    $region15: #{vicreg_forward.1} parent=1 // pred_check_branch
      %22 = sbr.rel (0) target = $region17
    $region16: #{vicreg_forward.1} parent=1 // pred_region
      _
    $region17: #{vicreg_forward.1} parent=1 // pred_fallthru
      _
    // Predicated region
    $region18: #{vicreg_forward.1} parent=1 // pred_check
      _
    $region19: #{vicreg_forward.1} parent=1 // pred_check_branch
      %24 = sbr.rel (0) target = $region21
    $region20: #{vicreg_forward.1} parent=1 // pred_region
      _
    $region21: #{vicreg_forward.1} parent=1 // pred_fallthru
      _
    // Predicated region
    $region22: #{vicreg_forward.1} parent=1 // pred_check
      _
    $region23: #{vicreg_forward.1} parent=1 // pred_check_branch
      %26 = sbr.rel (0) target = $region25
    $region24: #{vicreg_forward.1} parent=1 // pred_region
      _
    $region25: #{vicreg_forward.1} parent=1 // pred_fallthru
      _
    // Predicated region
    $region26: #{vicreg_forward.1} parent=1 // pred_check
      _
    $region27: #{vicreg_forward.1} parent=1 // pred_check_branch
      %28 = sbr.rel (0) target = $region29
    $region28: #{vicreg_forward.1} parent=1 // pred_region
      _
    $region29: #{vicreg_forward.1} parent=1 // pred_fallthru
      _
    // Predicated region
    $region30: #{vicreg_forward.1} parent=1 // pred_check
      _
    $region31: #{vicreg_forward.1} parent=1 // pred_check_branch
      %30 = sbr.rel (0) target = $region33
    $region32: #{vicreg_forward.1} parent=1 // pred_region
      _
    $region33: #{vicreg_forward.1} parent=1 // pred_fallthru
      _
    // Predicated region
    $region34: #{vicreg_forward.1} parent=1 // pred_check
      _
    $region35: #{vicreg_forward.1} parent=1 // pred_check_branch
      %32 = sbr.rel (0) target = $region37
    $region36: #{vicreg_forward.1} parent=1 // pred_region
      _
    $region37: #{vicreg_forward.1} parent=1 // pred_fallthru
      _
    %v33 = vld [vmem:[%s2] sm:$0xf]
    %v34 = vld [vmem:[%s2 + $0x4] sm:$0xf]
    %v35 = vld [vmem:[%s2 + $0x8] sm:$0xf]
    %v36 = vld [vmem:[%s2 + $0xc] sm:$0xf]
    %v37 = vld [vmem:[%s2 + $0x10] sm:$0xf]
    %v38 = vld [vmem:[%s2 + $0x14] sm:$0xf]
    %v39 = vld [vmem:[%s2 + $0x18] sm:$0xf]
    %v40 = vld [vmem:[%s2 + $0x1c] sm:$0xf]
    %v41 = vld [vmem:[%s2 + $0x20] sm:$0xf]
    %v42 = vld [vmem:[%s2 + $0x24] sm:$0xf]
    %v43 = vld [vmem:[%s2 + $0x28] sm:$0xf]
    %v44 = vld [vmem:[%s2 + $0x2c] sm:$0xf]
    %v45 = vld [vmem:[%s2 + $0x30] sm:$0xf]
    %v46 = vld [vmem:[%s2 + $0x34] sm:$0xf]
    %v47 = vld [vmem:[%s2 + $0x38] sm:$0xf]
    %v48 = vld [vmem:[%s2 + $0x3c] sm:$0xf]
    %v49 = vld [vmem:[%s2 + $0x40] sm:$0xf]
    %v50 = vld [vmem:[%s2 + $0x44] sm:$0xf]
    %v51 = vld [vmem:[%s2 + $0x48] sm:$0xf]
    %v52 = vld [vmem:[%s2 + $0x4c] sm:$0xf]
    %v53 = vld [vmem:[%s2 + $0x50] sm:$0xf]
    %v54 = vld [vmem:[%s2 + $0x54] sm:$0xf]
    %v55 = vld [vmem:[%s2 + $0x58] sm:$0xf]
    %v56 = vld [vmem:[%s2 + $0x5c] sm:$0xf]
    %v57 = vld [vmem:[%s2 + $0x60] sm:$0xf]
    %v58 = vld [vmem:[%s2 + $0x64] sm:$0xf]
    %v59 = vld [vmem:[%s2 + $0x68] sm:$0xf]
    %v60 = vld [vmem:[%s2 + $0x6c] sm:$0xf]
    %v61 = vld [vmem:[%s2 + $0x70] sm:$0xf]
    %v62 = vld [vmem:[%s2 + $0x74] sm:$0xf]
    %v63 = vld [vmem:[%s2 + $0x78] sm:$0xf]
    %v64 = vld [vmem:[%s2 + $0x7c] sm:$0xf]
    %v65 = vld [vmem:[%s2 + $0x80] sm:$0xf]
    %v66 = vld [vmem:[%s2 + $0x84] sm:$0xf]
    %v67 = vld [vmem:[%s2 + $0x88] sm:$0xf]
    %v68 = vld [vmem:[%s2 + $0x8c] sm:$0xf]
    %v69 = vld [vmem:[%s2 + $0x90] sm:$0xf]
    %v70 = vld [vmem:[%s2 + $0x94] sm:$0xf]
    %v71 = vld [vmem:[%s2 + $0x98] sm:$0xf]
    %v72 = vld [vmem:[%s2 + $0x9c] sm:$0xf]
    %v73 = vld [vmem:[%s2 + $0xa0] sm:$0xf]
    %v74 = vld [vmem:[%s2 + $0xa4] sm:$0xf]
    %v75 = vld [vmem:[%s2 + $0xa8] sm:$0xf]
    %v76 = vld [vmem:[%s2 + $0xac] sm:$0xf]
    %v77 = vld [vmem:[%s2 + $0xb0] sm:$0xf]
    %v78 = vld [vmem:[%s2 + $0xb4] sm:$0xf]
    %v79 = vld [vmem:[%s2 + $0xb8] sm:$0xf]
    %v80 = vld [vmem:[%s2 + $0xbc] sm:$0xf]
    %v81 = vld [vmem:[%s2 + $0xc0] sm:$0xf]
    %v82 = vld [vmem:[%s2 + $0xc4] sm:$0xf]
    %v83 = vld [vmem:[%s2 + $0xc8] sm:$0xf]
    %v84 = vld [vmem:[%s2 + $0xcc] sm:$0xf]
    %v85 = vld [vmem:[%s2 + $0xd0] sm:$0xf]
    %v86 = vld [vmem:[%s2 + $0xd4] sm:$0xf]
    %v87 = vld [vmem:[%s2 + $0xd8] sm:$0xf]
    %v88 = vld [vmem:[%s2 + $0xdc] sm:$0xf]
    %v89 = vld [vmem:[%s2 + $0xe0] sm:$0xf]
    %v90 = vld [vmem:[%s2 + $0xe4] sm:$0xf]
    %v91 = vld [vmem:[%s2 + $0xe8] sm:$0xf]
    %v92 = vld [vmem:[%s2 + $0xec] sm:$0xf]
    %v93 = vld [vmem:[%s2 + $0xf0] sm:$0xf]
    %v94 = vld [vmem:[%s2 + $0xf4] sm:$0xf]
    %v95 = vld [vmem:[%s2 + $0xf8] sm:$0xf]
    %v96 = vld [vmem:[%s2 + $0xfc] sm:$0xf]
    %v97 = vld [vmem:[%s2 + $0x100] sm:$0xf]
    %v98 = vld [vmem:[%s2 + $0x104] sm:$0xf]
    %v99 = vld [vmem:[%s2 + $0x108] sm:$0xf]
    %v100 = vld [vmem:[%s2 + $0x10c] sm:$0xf]
    %v101 = vld [vmem:[%s2 + $0x110] sm:$0xf]
    %v102 = vld [vmem:[%s2 + $0x114] sm:$0xf]
    %v103 = vld [vmem:[%s2 + $0x118] sm:$0xf]
    %v104 = vld [vmem:[%s2 + $0x11c] sm:$0xf]
    %v105 = vld [vmem:[%s2 + $0x120] sm:$0xf]
    %v106 = vld [vmem:[%s2 + $0x124] sm:$0xf]
    %v107 = vld [vmem:[%s2 + $0x128] sm:$0xf]
    %v108 = vld [vmem:[%s2 + $0x12c] sm:$0xf]
    %v109 = vld [vmem:[%s2 + $0x130] sm:$0xf]
    %v110 = vld [vmem:[%s2 + $0x134] sm:$0xf]
    %v111 = vld [vmem:[%s2 + $0x138] sm:$0xf]
    %v112 = vld [vmem:[%s2 + $0x13c] sm:$0xf]
    %v113 = vld [vmem:[%s2 + $0x140] sm:$0xf]
    %v114 = vld [vmem:[%s2 + $0x144] sm:$0xf]
    %v115 = vld [vmem:[%s2 + $0x148] sm:$0xf]
    %v116 = vld [vmem:[%s2 + $0x14c] sm:$0xf]
    %v117 = vld [vmem:[%s2 + $0x150] sm:$0xf]
    %v118 = vld [vmem:[%s2 + $0x154] sm:$0xf]
    %v119 = vld [vmem:[%s2 + $0x158] sm:$0xf]
    %v120 = vld [vmem:[%s2 + $0x15c] sm:$0xf]
    %v121 = vld [vmem:[%s2 + $0x160] sm:$0xf]
    %v122 = vld [vmem:[%s2 + $0x164] sm:$0xf]
    %v123 = vld [vmem:[%s2 + $0x168] sm:$0xf]
    %v124 = vld [vmem:[%s2 + $0x16c] sm:$0xf]
    %v125 = vld [vmem:[%s2 + $0x170] sm:$0xf]
    %v126 = vld [vmem:[%s2 + $0x174] sm:$0xf]
    %v127 = vld [vmem:[%s2 + $0x178] sm:$0xf]
    %v128 = vld [vmem:[%s2 + $0x17c] sm:$0xf]
    %v129 = vld [vmem:[%s2 + $0x180] sm:$0xf]
    %v130 = vld [vmem:[%s2 + $0x184] sm:$0xf]
    %v131 = vld [vmem:[%s2 + $0x188] sm:$0xf]
    %v132 = vld [vmem:[%s2 + $0x18c] sm:$0xf]
    %v133 = vld [vmem:[%s2 + $0x190] sm:$0xf]
    %v134 = vld [vmem:[%s2 + $0x194] sm:$0xf]
    %v135 = vld [vmem:[%s2 + $0x198] sm:$0xf]
    %v136 = vld [vmem:[%s2 + $0x19c] sm:$0xf]
    %v137 = vld [vmem:[%s2 + $0x1a0] sm:$0xf]
    %v138 = vld [vmem:[%s2 + $0x1a4] sm:$0xf]
    %v139 = vld [vmem:[%s2 + $0x1a8] sm:$0xf]
    %v140 = vld [vmem:[%s2 + $0x1ac] sm:$0xf]
    %v141 = vld [vmem:[%s2 + $0x1b0] sm:$0xf]
    %v142 = vld [vmem:[%s2 + $0x1b4] sm:$0xf]
    %v143 = vld [vmem:[%s2 + $0x1b8] sm:$0xf]
    %v144 = vld [vmem:[%s2 + $0x1bc] sm:$0xf]
    %v145 = vld [vmem:[%s2 + $0x1c0] sm:$0xf]
    %v146 = vld [vmem:[%s2 + $0x1c4] sm:$0xf]
    %v147 = vld [vmem:[%s2 + $0x1c8] sm:$0xf]
    %v148 = vld [vmem:[%s2 + $0x1cc] sm:$0xf]
    %v149 = vld [vmem:[%s2 + $0x1d0] sm:$0xf]
    %v150 = vld [vmem:[%s2 + $0x1d4] sm:$0xf]
    %v151 = vld [vmem:[%s2 + $0x1d8] sm:$0xf]
    %v152 = vld [vmem:[%s2 + $0x1dc] sm:$0xf]
    %v153 = vld [vmem:[%s2 + $0x1e0] sm:$0xf]
    %v154 = vld [vmem:[%s2 + $0x1e4] sm:$0xf]
    %v155 = vld [vmem:[%s2 + $0x1e8] sm:$0xf]
    %v156 = vld [vmem:[%s2 + $0x1ec] sm:$0xf]
    %v157 = vld [vmem:[%s2 + $0x1f0] sm:$0xf]
    %v158 = vld [vmem:[%s2 + $0x1f4] sm:$0xf]
    %v159 = vld [vmem:[%s2 + $0x1f8] sm:$0xf]
    %v160 = vld [vmem:[%s2 + $0x1fc] sm:$0xf]
    %v161 = vld [vmem:[%s3] sm:$0x1]
    %v162 = vld [vmem:[%s4] sm:$0xf]
    %v163 = vld [vmem:[%s4 + $0x4] sm:$0xf]
    %v164 = vld [vmem:[%s4 + $0x8] sm:$0xf]
    %v165 = vld [vmem:[%s4 + $0xc] sm:$0xf]
    %v166 = vld [vmem:[%s4 + $0x10] sm:$0xf]
    %v167 = vld [vmem:[%s4 + $0x14] sm:$0xf]
    %v168 = vld [vmem:[%s4 + $0x18] sm:$0xf]
    %v169 = vld [vmem:[%s4 + $0x1c] sm:$0xf]
    %v170 = vld [vmem:[%s4 + $0x20] sm:$0xf]
    %v171 = vld [vmem:[%s4 + $0x24] sm:$0xf]
    %v172 = vld [vmem:[%s4 + $0x28] sm:$0xf]
    %v173 = vld [vmem:[%s4 + $0x2c] sm:$0xf]
    %v174 = vld [vmem:[%s4 + $0x30] sm:$0xf]
    %v175 = vld [vmem:[%s4 + $0x34] sm:$0xf]
    %v176 = vld [vmem:[%s4 + $0x38] sm:$0xf]
    %v177 = vld [vmem:[%s4 + $0x3c] sm:$0xf]
    %v178 = vld [vmem:[%s5] sm:$0x1]
    %v179 = vld [vmem:[%s6] sm:$0x1]
    %v180 = vld [vmem:[%s7] sm:$0x1]
    %v181 = vld [vmem:[%s8] sm:$0xf]
    %v182 = vld [vmem:[%s8 + $0x4] sm:$0xf]
    %v183 = vld [vmem:[%s8 + $0x8] sm:$0xf]
    %v184 = vld [vmem:[%s8 + $0xc] sm:$0xf]
    %v185 = vld [vmem:[%s8 + $0x10] sm:$0xf]
    %v186 = vld [vmem:[%s8 + $0x14] sm:$0xf]
    %v187 = vld [vmem:[%s8 + $0x18] sm:$0xf]
    %v188 = vld [vmem:[%s8 + $0x1c] sm:$0xf]
    %v189 = vld [vmem:[%s8 + $0x20] sm:$0xf]
    %v190 = vld [vmem:[%s8 + $0x24] sm:$0xf]
    %v191 = vld [vmem:[%s8 + $0x28] sm:$0xf]
    %v192 = vld [vmem:[%s8 + $0x2c] sm:$0xf]
    %v193 = vld [vmem:[%s8 + $0x30] sm:$0xf]
    %v194 = vld [vmem:[%s8 + $0x34] sm:$0xf]
    %v195 = vld [vmem:[%s8 + $0x38] sm:$0xf]
    %v196 = vld [vmem:[%s8 + $0x3c] sm:$0xf]
    %v197 = vld [vmem:[%s0] sm:$0xff]
    %v198 = vld [vmem:[%s0 + $0x8] sm:$0xff]
    %v199 = vld [vmem:[%s0 + $0x10] sm:$0xff]
    %v200 = vld [vmem:[%s0 + $0x18] sm:$0xff]
    %v201 = vld [vmem:[%s0 + $0x20] sm:$0xff]
    %v202 = vld [vmem:[%s0 + $0x28] sm:$0xff]
    %v203 = vld [vmem:[%s0 + $0x30] sm:$0xff]
    %v204 = vld [vmem:[%s0 + $0x38] sm:$0xff]
    %v205 = vpack.c.bf16 %v197, %v197
    %v206 = vpack.c.bf16 %v198, %v198
    %v207 = vpack.c.bf16 %v199, %v199
    %v208 = vpack.c.bf16 %v200, %v200
    %v209 = vpack.c.bf16 %v201, %v201
    %v210 = vpack.c.bf16 %v202, %v202
    %v211 = vpack.c.bf16 %v203, %v203
    %v212 = vpack.c.bf16 %v204, %v204
    %v214 = vperm.slane %v161, 0
    %v344 = vunpack.c.l.b16 %v33
    %v345 = vunpack.c.l.b16 %v34
    %v346 = vunpack.c.l.b16 %v35
    %v347 = vunpack.c.l.b16 %v36
    %v348 = vunpack.c.l.b16 %v37
    %v349 = vunpack.c.l.b16 %v38
    %v350 = vunpack.c.l.b16 %v39
    %v351 = vunpack.c.l.b16 %v40
    %v352 = vunpack.c.l.b16 %v41
    %v353 = vunpack.c.l.b16 %v42
    %v354 = vunpack.c.l.b16 %v43
    %v355 = vunpack.c.l.b16 %v44
    %v356 = vunpack.c.l.b16 %v45
    %v357 = vunpack.c.l.b16 %v46
    %v358 = vunpack.c.l.b16 %v47
    %v359 = vunpack.c.l.b16 %v48
    %v360 = vunpack.c.l.b16 %v49
    %v361 = vunpack.c.l.b16 %v50
    %v362 = vunpack.c.l.b16 %v51
    %v363 = vunpack.c.l.b16 %v52
    %v364 = vunpack.c.l.b16 %v53
    %v365 = vunpack.c.l.b16 %v54
    %v366 = vunpack.c.l.b16 %v55
    %v367 = vunpack.c.l.b16 %v56
    %v368 = vunpack.c.l.b16 %v57
    %v369 = vunpack.c.l.b16 %v58
    %v370 = vunpack.c.l.b16 %v59
    %v371 = vunpack.c.l.b16 %v60
    %v372 = vunpack.c.l.b16 %v61
    %v373 = vunpack.c.l.b16 %v62
    %v374 = vunpack.c.l.b16 %v63
    %v375 = vunpack.c.l.b16 %v64
    %v376 = vunpack.c.l.b16 %v65
    %v377 = vunpack.c.l.b16 %v66
    %v378 = vunpack.c.l.b16 %v67
    %v379 = vunpack.c.l.b16 %v68
    %v380 = vunpack.c.l.b16 %v69
    %v381 = vunpack.c.l.b16 %v70
    %v382 = vunpack.c.l.b16 %v71
    %v383 = vunpack.c.l.b16 %v72
    %v384 = vunpack.c.l.b16 %v73
    %v385 = vunpack.c.l.b16 %v74
    %v386 = vunpack.c.l.b16 %v75
    %v387 = vunpack.c.l.b16 %v76
    %v388 = vunpack.c.l.b16 %v77
    %v389 = vunpack.c.l.b16 %v78
    %v390 = vunpack.c.l.b16 %v79
    %v391 = vunpack.c.l.b16 %v80
    %v392 = vunpack.c.l.b16 %v81
    %v393 = vunpack.c.l.b16 %v82
    %v394 = vunpack.c.l.b16 %v83
    %v395 = vunpack.c.l.b16 %v84
    %v396 = vunpack.c.l.b16 %v85
    %v397 = vunpack.c.l.b16 %v86
    %v398 = vunpack.c.l.b16 %v87
    %v399 = vunpack.c.l.b16 %v88
    %v400 = vunpack.c.l.b16 %v89
    %v401 = vunpack.c.l.b16 %v90
    %v402 = vunpack.c.l.b16 %v91
    %v403 = vunpack.c.l.b16 %v92
    %v404 = vunpack.c.l.b16 %v93
    %v405 = vunpack.c.l.b16 %v94
    %v406 = vunpack.c.l.b16 %v95
    %v407 = vunpack.c.l.b16 %v96
    %v408 = vunpack.c.l.b16 %v97
    %v409 = vunpack.c.l.b16 %v98
    %v410 = vunpack.c.l.b16 %v99
    %v411 = vunpack.c.l.b16 %v100
    %v412 = vunpack.c.l.b16 %v101
    %v413 = vunpack.c.l.b16 %v102
    %v414 = vunpack.c.l.b16 %v103
    %v415 = vunpack.c.l.b16 %v104
    %v416 = vunpack.c.l.b16 %v105
    %v417 = vunpack.c.l.b16 %v106
    %v418 = vunpack.c.l.b16 %v107
    %v419 = vunpack.c.l.b16 %v108
    %v420 = vunpack.c.l.b16 %v109
    %v421 = vunpack.c.l.b16 %v110
    %v422 = vunpack.c.l.b16 %v111
    %v423 = vunpack.c.l.b16 %v112
    %v424 = vunpack.c.l.b16 %v113
    %v425 = vunpack.c.l.b16 %v114
    %v426 = vunpack.c.l.b16 %v115
    %v427 = vunpack.c.l.b16 %v116
    %v428 = vunpack.c.l.b16 %v117
    %v429 = vunpack.c.l.b16 %v118
    %v430 = vunpack.c.l.b16 %v119
    %v431 = vunpack.c.l.b16 %v120
    %v432 = vunpack.c.l.b16 %v121
    %v433 = vunpack.c.l.b16 %v122
    %v434 = vunpack.c.l.b16 %v123
    %v435 = vunpack.c.l.b16 %v124
    %v436 = vunpack.c.l.b16 %v125
    %v437 = vunpack.c.l.b16 %v126
    %v438 = vunpack.c.l.b16 %v127
    %v439 = vunpack.c.l.b16 %v128
    %v440 = vunpack.c.l.b16 %v129
    %v441 = vunpack.c.l.b16 %v130
    %v442 = vunpack.c.l.b16 %v131
    %v443 = vunpack.c.l.b16 %v132
    %v444 = vunpack.c.l.b16 %v133
    %v445 = vunpack.c.l.b16 %v134
    %v446 = vunpack.c.l.b16 %v135
    %v447 = vunpack.c.l.b16 %v136
    %v448 = vunpack.c.l.b16 %v137
    %v449 = vunpack.c.l.b16 %v138
    %v450 = vunpack.c.l.b16 %v139
    %v451 = vunpack.c.l.b16 %v140
    %v452 = vunpack.c.l.b16 %v141
    %v453 = vunpack.c.l.b16 %v142
    %v454 = vunpack.c.l.b16 %v143
    %v455 = vunpack.c.l.b16 %v144
    %v456 = vunpack.c.l.b16 %v145
    %v457 = vunpack.c.l.b16 %v146
    %v458 = vunpack.c.l.b16 %v147
    %v459 = vunpack.c.l.b16 %v148
    %v460 = vunpack.c.l.b16 %v149
    %v461 = vunpack.c.l.b16 %v150
    %v462 = vunpack.c.l.b16 %v151
    %v463 = vunpack.c.l.b16 %v152
    %v464 = vunpack.c.l.b16 %v153
    %v465 = vunpack.c.l.b16 %v154
    %v466 = vunpack.c.l.b16 %v155
    %v467 = vunpack.c.l.b16 %v156
    %v468 = vunpack.c.l.b16 %v157
    %v469 = vunpack.c.l.b16 %v158
    %v470 = vunpack.c.l.b16 %v159
    %v471 = vunpack.c.l.b16 %v160
    %v472 = vpack.c.b16 %v345, %v344
    %v473 = vpack.c.b16 %v347, %v346
    %v474 = vpack.c.b16 %v349, %v348
    %v475 = vpack.c.b16 %v351, %v350
    %v476 = vpack.c.b16 %v353, %v352
    %v477 = vpack.c.b16 %v355, %v354
    %v478 = vpack.c.b16 %v357, %v356
    %v479 = vpack.c.b16 %v359, %v358
    %v480 = vpack.c.b16 %v361, %v360
    %v481 = vpack.c.b16 %v363, %v362
    %v482 = vpack.c.b16 %v365, %v364
    %v483 = vpack.c.b16 %v367, %v366
    %v484 = vpack.c.b16 %v369, %v368
    %v485 = vpack.c.b16 %v371, %v370
    %v486 = vpack.c.b16 %v373, %v372
    %v487 = vpack.c.b16 %v375, %v374
    %v488 = vpack.c.b16 %v377, %v376
    %v489 = vpack.c.b16 %v379, %v378
    %v490 = vpack.c.b16 %v381, %v380
    %v491 = vpack.c.b16 %v383, %v382
    %v492 = vpack.c.b16 %v385, %v384
    %v493 = vpack.c.b16 %v387, %v386
    %v494 = vpack.c.b16 %v389, %v388
    %v495 = vpack.c.b16 %v391, %v390
    %v496 = vpack.c.b16 %v393, %v392
    %v497 = vpack.c.b16 %v395, %v394
    %v498 = vpack.c.b16 %v397, %v396
    %v499 = vpack.c.b16 %v399, %v398
    %v500 = vpack.c.b16 %v401, %v400
    %v501 = vpack.c.b16 %v403, %v402
    %v502 = vpack.c.b16 %v405, %v404
    %v503 = vpack.c.b16 %v407, %v406
    %v504 = vpack.c.b16 %v409, %v408
    %v505 = vpack.c.b16 %v411, %v410
    %v506 = vpack.c.b16 %v413, %v412
    %v507 = vpack.c.b16 %v415, %v414
    %v508 = vpack.c.b16 %v417, %v416
    %v509 = vpack.c.b16 %v419, %v418
    %v510 = vpack.c.b16 %v421, %v420
    %v511 = vpack.c.b16 %v423, %v422
    %v512 = vpack.c.b16 %v425, %v424
    %v513 = vpack.c.b16 %v427, %v426
    %v514 = vpack.c.b16 %v429, %v428
    %v515 = vpack.c.b16 %v431, %v430
    %v516 = vpack.c.b16 %v433, %v432
    %v517 = vpack.c.b16 %v435, %v434
    %v518 = vpack.c.b16 %v437, %v436
    %v519 = vpack.c.b16 %v439, %v438
    %v520 = vpack.c.b16 %v441, %v440
    %v521 = vpack.c.b16 %v443, %v442
    %v522 = vpack.c.b16 %v445, %v444
    %v523 = vpack.c.b16 %v447, %v446
    %v524 = vpack.c.b16 %v449, %v448
    %v525 = vpack.c.b16 %v451, %v450
    %v526 = vpack.c.b16 %v453, %v452
    %v527 = vpack.c.b16 %v455, %v454
    %v528 = vpack.c.b16 %v457, %v456
    %v529 = vpack.c.b16 %v459, %v458
    %v530 = vpack.c.b16 %v461, %v460
    %v531 = vpack.c.b16 %v463, %v462
    %v532 = vpack.c.b16 %v465, %v464
    %v533 = vpack.c.b16 %v467, %v466
    %v534 = vpack.c.b16 %v469, %v468
    %v535 = vpack.c.b16 %v471, %v470
    %600 = vmatpush.bf16.msra.mxu0 %v479
    %601 = vmatpush.bf16.msra.mxu0 %v478
    %602 = vmatpush.bf16.msra.mxu0 %v477
    %603 = vmatpush.bf16.msra.mxu0 %v476
    %604 = vmatpush.bf16.msra.mxu0 %v475
    %605 = vmatpush.bf16.msra.mxu0 %v474
    %606 = vmatpush.bf16.msra.mxu0 %v473
    %607 = vmatpush.bf16.msra.mxu0 %v472
    %608 = vmatmul.bf16.gmra.mxu0 %v205
    %v609 = vpop.f32.mrf.mxu0
    %v610 = vadd.f32 %v214, %v609
    %v611 = vpop.f32.mrf.mxu0
    %612 = vdwg.mxu0
    %613 = vmatpush.bf16.msra.mxu0 %v487
    %614 = vmatpush.bf16.msra.mxu0 %v486
    %615 = vmatpush.bf16.msra.mxu0 %v485
    %616 = vmatpush.bf16.msra.mxu0 %v484
    %617 = vmatpush.bf16.msra.mxu0 %v483
    %618 = vmatpush.bf16.msra.mxu0 %v482
    %619 = vmatpush.bf16.msra.mxu0 %v481
    %620 = vmatpush.bf16.msra.mxu0 %v480
    %621 = vmatmul.bf16.gmra.mxu0 %v206
    %v622 = vpop.f32.mrf.mxu0
    %v623 = vadd.f32 %v610, %v622
    %v624 = vpop.f32.mrf.mxu0
    %625 = vdwg.mxu0
    %626 = vmatpush.bf16.msra.mxu0 %v495
    %627 = vmatpush.bf16.msra.mxu0 %v494
    %628 = vmatpush.bf16.msra.mxu0 %v493
    %629 = vmatpush.bf16.msra.mxu0 %v492
    %630 = vmatpush.bf16.msra.mxu0 %v491
    %631 = vmatpush.bf16.msra.mxu0 %v490
    %632 = vmatpush.bf16.msra.mxu0 %v489
    %633 = vmatpush.bf16.msra.mxu0 %v488
    %634 = vmatmul.bf16.gmra.mxu0 %v207
    %v635 = vpop.f32.mrf.mxu0
    %v636 = vadd.f32 %v623, %v635
    %v637 = vpop.f32.mrf.mxu0
    %638 = vdwg.mxu0
    %639 = vmatpush.bf16.msra.mxu0 %v503
    %640 = vmatpush.bf16.msra.mxu0 %v502
    %641 = vmatpush.bf16.msra.mxu0 %v501
    %642 = vmatpush.bf16.msra.mxu0 %v500
    %643 = vmatpush.bf16.msra.mxu0 %v499
    %644 = vmatpush.bf16.msra.mxu0 %v498
    %645 = vmatpush.bf16.msra.mxu0 %v497
    %646 = vmatpush.bf16.msra.mxu0 %v496
    %647 = vmatmul.bf16.gmra.mxu0 %v208
    %v648 = vpop.f32.mrf.mxu0
    %v649 = vadd.f32 %v636, %v648
    %v650 = vpop.f32.mrf.mxu0
    %651 = vdwg.mxu0
    %652 = vmatpush.bf16.msra.mxu0 %v511
    %653 = vmatpush.bf16.msra.mxu0 %v510
    %654 = vmatpush.bf16.msra.mxu0 %v509
    %655 = vmatpush.bf16.msra.mxu0 %v508
    %656 = vmatpush.bf16.msra.mxu0 %v507
    %657 = vmatpush.bf16.msra.mxu0 %v506
    %658 = vmatpush.bf16.msra.mxu0 %v505
    %659 = vmatpush.bf16.msra.mxu0 %v504
    %660 = vmatmul.bf16.gmra.mxu0 %v209
    %v661 = vpop.f32.mrf.mxu0
    %v662 = vadd.f32 %v649, %v661
    %v663 = vpop.f32.mrf.mxu0
    %664 = vdwg.mxu0
    %665 = vmatpush.bf16.msra.mxu0 %v519
    %666 = vmatpush.bf16.msra.mxu0 %v518
    %667 = vmatpush.bf16.msra.mxu0 %v517
    %668 = vmatpush.bf16.msra.mxu0 %v516
    %669 = vmatpush.bf16.msra.mxu0 %v515
    %670 = vmatpush.bf16.msra.mxu0 %v514
    %671 = vmatpush.bf16.msra.mxu0 %v513
    %672 = vmatpush.bf16.msra.mxu0 %v512
    %673 = vmatmul.bf16.gmra.mxu0 %v210
    %v674 = vpop.f32.mrf.mxu0
    %v675 = vadd.f32 %v662, %v674
    %v676 = vpop.f32.mrf.mxu0
    %677 = vdwg.mxu0
    %678 = vmatpush.bf16.msra.mxu0 %v527
    %679 = vmatpush.bf16.msra.mxu0 %v526
    %680 = vmatpush.bf16.msra.mxu0 %v525
    %681 = vmatpush.bf16.msra.mxu0 %v524
    %682 = vmatpush.bf16.msra.mxu0 %v523
    %683 = vmatpush.bf16.msra.mxu0 %v522
    %684 = vmatpush.bf16.msra.mxu0 %v521
    %685 = vmatpush.bf16.msra.mxu0 %v520
    %686 = vmatmul.bf16.gmra.mxu0 %v211
    %v687 = vpop.f32.mrf.mxu0
    %v688 = vadd.f32 %v675, %v687
    %v689 = vpop.f32.mrf.mxu0
    %690 = vdwg.mxu0
    %691 = vmatpush.bf16.msra.mxu0 %v535
    %692 = vmatpush.bf16.msra.mxu0 %v534
    %693 = vmatpush.bf16.msra.mxu0 %v533
    %694 = vmatpush.bf16.msra.mxu0 %v532
    %695 = vmatpush.bf16.msra.mxu0 %v531
    %696 = vmatpush.bf16.msra.mxu0 %v530
    %697 = vmatpush.bf16.msra.mxu0 %v529
    %698 = vmatpush.bf16.msra.mxu0 %v528
    %699 = vmatmul.bf16.gmra.mxu0 %v212
    %v700 = vpop.f32.mrf.mxu0
    %v701 = vadd.f32 %v688, %v700
    %v702 = vpop.f32.mrf.mxu0
    %703 = vdwg.mxu0
    %v704 = vpack.c.bf16 %v701, %v701
    %v706 = vperm.slane %v178, 0
    %v724 = vunpack.c.l.b16 %v162
    %v725 = vunpack.c.l.b16 %v163
    %v726 = vunpack.c.l.b16 %v164
    %v727 = vunpack.c.l.b16 %v165
    %v728 = vunpack.c.l.b16 %v166
    %v729 = vunpack.c.l.b16 %v167
    %v730 = vunpack.c.l.b16 %v168
    %v731 = vunpack.c.l.b16 %v169
    %v732 = vunpack.c.l.b16 %v170
    %v733 = vunpack.c.l.b16 %v171
    %v734 = vunpack.c.l.b16 %v172
    %v735 = vunpack.c.l.b16 %v173
    %v736 = vunpack.c.l.b16 %v174
    %v737 = vunpack.c.l.b16 %v175
    %v738 = vunpack.c.l.b16 %v176
    %v739 = vunpack.c.l.b16 %v177
    %v740 = vpack.c.b16 %v725, %v724
    %v741 = vpack.c.b16 %v727, %v726
    %v742 = vpack.c.b16 %v729, %v728
    %v743 = vpack.c.b16 %v731, %v730
    %v744 = vpack.c.b16 %v733, %v732
    %v745 = vpack.c.b16 %v735, %v734
    %v746 = vpack.c.b16 %v737, %v736
    %v747 = vpack.c.b16 %v739, %v738
    %756 = vmatpush.bf16.msra.mxu0 %v747
    %757 = vmatpush.bf16.msra.mxu0 %v746
    %758 = vmatpush.bf16.msra.mxu0 %v745
    %759 = vmatpush.bf16.msra.mxu0 %v744
    %760 = vmatpush.bf16.msra.mxu0 %v743
    %761 = vmatpush.bf16.msra.mxu0 %v742
    %762 = vmatpush.bf16.msra.mxu0 %v741
    %763 = vmatpush.bf16.msra.mxu0 %v740
    %764 = vmatmul.bf16.gmra.mxu0 %v704
    %v765 = vpop.f32.mrf.mxu0
    %v766 = vadd.f32 %v706, %v765
    %v767 = vpop.f32.mrf.mxu0
    %768 = vdwg.mxu0
    %v769 = vrot.slane %v766, 4
    %v770 = vadd.f32 %v766, %v769
    %v771 = vrot.slane %v770, 2
    %v772 = vadd.f32 %v770, %v771
    %v773 = vrot.slane %v772, 1
    %v774 = vadd.f32 %v772, %v773
    %v775 = vrcp.pop 8.0
    %v776 = vmul.f32 8.0, %v775
    %v777 = vsub.f32 1.0, %v776
    %v778 = vmul.f32 %v775, %v777
    %v779 = vadd.f32 %v775, %v778
    %vm780 = vweird.f32 %v775
    %v781 = vsel %vm780, %v775, %v779
    %v782 = vmul.f32 %v774, %v781
    %v783 = vsub.f32 %v766, %v782
    %v784 = vmul.f32 %v783, %v783
    %v785 = vrot.slane %v784, 4
    %v786 = vadd.f32 %v784, %v785
    %v787 = vrot.slane %v786, 2
    %v788 = vadd.f32 %v786, %v787
    %v789 = vrot.slane %v788, 1
    %v790 = vadd.f32 %v788, %v789
    %v791 = vmul.f32 %v790, %v781
    %v792 = vadd.f32 %v791, 1e-05
    %v793 = vrsqrt.pop %v792
    %v794 = vmul.f32 %v793, %v792
    %v795 = vmul.f32 %v794, %v793
    %v796 = vmul.f32 0.5, %v795
    %v797 = vsub.f32 1.5, %v796
    %v798 = vmul.f32 %v793, %v797
    %vm799 = vweird.f32 %v792
    %vm800 = vweird.f32 %v793
    %vm801 = vmor %vm799, %vm800
    %v802 = vsel %vm801, %v793, %v798
    %v803 = vmul.f32 %v783, %v802
    %v805 = vperm.slane %v179, 0
    %v807 = vmul.f32 %v803, %v805
    %v809 = vperm.slane %v180, 0
    %v811 = vadd.f32 %v807, %v809
    %v812 = vmax.f32 %v811, 0.0
    %v813 = vpack.c.bf16 %v812, %v812
    %v830 = vunpack.c.l.b16 %v181
    %v831 = vunpack.c.l.b16 %v182
    %v832 = vunpack.c.l.b16 %v183
    %v833 = vunpack.c.l.b16 %v184
    %v834 = vunpack.c.l.b16 %v185
    %v835 = vunpack.c.l.b16 %v186
    %v836 = vunpack.c.l.b16 %v187
    %v837 = vunpack.c.l.b16 %v188
    %v838 = vunpack.c.l.b16 %v189
    %v839 = vunpack.c.l.b16 %v190
    %v840 = vunpack.c.l.b16 %v191
    %v841 = vunpack.c.l.b16 %v192
    %v842 = vunpack.c.l.b16 %v193
    %v843 = vunpack.c.l.b16 %v194
    %v844 = vunpack.c.l.b16 %v195
    %v845 = vunpack.c.l.b16 %v196
    %v846 = vpack.c.b16 %v831, %v830
    %v847 = vpack.c.b16 %v833, %v832
    %v848 = vpack.c.b16 %v835, %v834
    %v849 = vpack.c.b16 %v837, %v836
    %v850 = vpack.c.b16 %v839, %v838
    %v851 = vpack.c.b16 %v841, %v840
    %v852 = vpack.c.b16 %v843, %v842
    %v853 = vpack.c.b16 %v845, %v844
    %862 = vmatpush.bf16.msra.mxu0 %v853
    %863 = vmatpush.bf16.msra.mxu0 %v852
    %864 = vmatpush.bf16.msra.mxu0 %v851
    %865 = vmatpush.bf16.msra.mxu0 %v850
    %866 = vmatpush.bf16.msra.mxu0 %v849
    %867 = vmatpush.bf16.msra.mxu0 %v848
    %868 = vmatpush.bf16.msra.mxu0 %v847
    %869 = vmatpush.bf16.msra.mxu0 %v846
    %870 = vmatmul.bf16.gmra.mxu0 %v813
    %v871 = vpop.f32.mrf.mxu0
    %v872 = vadd.f32 0.0, %v871
    %v873 = vpop.f32.mrf.mxu0
    %874 = vdwg.mxu0
    %v875 = vld [vmem:[%s1] sm:$0xff]
    %v876 = vld [vmem:[%s1 + $0x8] sm:$0xff]
    %v877 = vld [vmem:[%s1 + $0x10] sm:$0xff]
    %v878 = vld [vmem:[%s1 + $0x18] sm:$0xff]
    %v879 = vld [vmem:[%s1 + $0x20] sm:$0xff]
    %v880 = vld [vmem:[%s1 + $0x28] sm:$0xff]
    %v881 = vld [vmem:[%s1 + $0x30] sm:$0xff]
    %v882 = vld [vmem:[%s1 + $0x38] sm:$0xff]
    %v883 = vpack.c.bf16 %v875, %v875
    %v884 = vpack.c.bf16 %v876, %v876
    %v885 = vpack.c.bf16 %v877, %v877
    %v886 = vpack.c.bf16 %v878, %v878
    %v887 = vpack.c.bf16 %v879, %v879
    %v888 = vpack.c.bf16 %v880, %v880
    %v889 = vpack.c.bf16 %v881, %v881
    %v890 = vpack.c.bf16 %v882, %v882
    %891 = vmatpush.bf16.msra.mxu0 %v479
    %892 = vmatpush.bf16.msra.mxu0 %v478
    %893 = vmatpush.bf16.msra.mxu0 %v477
    %894 = vmatpush.bf16.msra.mxu0 %v476
    %895 = vmatpush.bf16.msra.mxu0 %v475
    %896 = vmatpush.bf16.msra.mxu0 %v474
    %897 = vmatpush.bf16.msra.mxu0 %v473
    %898 = vmatpush.bf16.msra.mxu0 %v472
    %899 = vmatmul.bf16.gmra.mxu0 %v883
    %v900 = vpop.f32.mrf.mxu0
    %v901 = vadd.f32 %v214, %v900
    %v902 = vpop.f32.mrf.mxu0
    %903 = vdwg.mxu0
    %904 = vmatpush.bf16.msra.mxu0 %v487
    %905 = vmatpush.bf16.msra.mxu0 %v486
    %906 = vmatpush.bf16.msra.mxu0 %v485
    %907 = vmatpush.bf16.msra.mxu0 %v484
    %908 = vmatpush.bf16.msra.mxu0 %v483
    %909 = vmatpush.bf16.msra.mxu0 %v482
    %910 = vmatpush.bf16.msra.mxu0 %v481
    %911 = vmatpush.bf16.msra.mxu0 %v480
    %912 = vmatmul.bf16.gmra.mxu0 %v884
    %v913 = vpop.f32.mrf.mxu0
    %v914 = vadd.f32 %v901, %v913
    %v915 = vpop.f32.mrf.mxu0
    %916 = vdwg.mxu0
    %917 = vmatpush.bf16.msra.mxu0 %v495
    %918 = vmatpush.bf16.msra.mxu0 %v494
    %919 = vmatpush.bf16.msra.mxu0 %v493
    %920 = vmatpush.bf16.msra.mxu0 %v492
    %921 = vmatpush.bf16.msra.mxu0 %v491
    %922 = vmatpush.bf16.msra.mxu0 %v490
    %923 = vmatpush.bf16.msra.mxu0 %v489
    %924 = vmatpush.bf16.msra.mxu0 %v488
    %925 = vmatmul.bf16.gmra.mxu0 %v885
    %v926 = vpop.f32.mrf.mxu0
    %v927 = vadd.f32 %v914, %v926
    %v928 = vpop.f32.mrf.mxu0
    %929 = vdwg.mxu0
    %930 = vmatpush.bf16.msra.mxu0 %v503
    %931 = vmatpush.bf16.msra.mxu0 %v502
    %932 = vmatpush.bf16.msra.mxu0 %v501
    %933 = vmatpush.bf16.msra.mxu0 %v500
    %934 = vmatpush.bf16.msra.mxu0 %v499
    %935 = vmatpush.bf16.msra.mxu0 %v498
    %936 = vmatpush.bf16.msra.mxu0 %v497
    %937 = vmatpush.bf16.msra.mxu0 %v496
    %938 = vmatmul.bf16.gmra.mxu0 %v886
    %v939 = vpop.f32.mrf.mxu0
    %v940 = vadd.f32 %v927, %v939
    %v941 = vpop.f32.mrf.mxu0
    %942 = vdwg.mxu0
    %943 = vmatpush.bf16.msra.mxu0 %v511
    %944 = vmatpush.bf16.msra.mxu0 %v510
    %945 = vmatpush.bf16.msra.mxu0 %v509
    %946 = vmatpush.bf16.msra.mxu0 %v508
    %947 = vmatpush.bf16.msra.mxu0 %v507
    %948 = vmatpush.bf16.msra.mxu0 %v506
    %949 = vmatpush.bf16.msra.mxu0 %v505
    %950 = vmatpush.bf16.msra.mxu0 %v504
    %951 = vmatmul.bf16.gmra.mxu0 %v887
    %v952 = vpop.f32.mrf.mxu0
    %v953 = vadd.f32 %v940, %v952
    %v954 = vpop.f32.mrf.mxu0
    %955 = vdwg.mxu0
    %956 = vmatpush.bf16.msra.mxu0 %v519
    %957 = vmatpush.bf16.msra.mxu0 %v518
    %958 = vmatpush.bf16.msra.mxu0 %v517
    %959 = vmatpush.bf16.msra.mxu0 %v516
    %960 = vmatpush.bf16.msra.mxu0 %v515
    %961 = vmatpush.bf16.msra.mxu0 %v514
    %962 = vmatpush.bf16.msra.mxu0 %v513
    %963 = vmatpush.bf16.msra.mxu0 %v512
    %964 = vmatmul.bf16.gmra.mxu0 %v888
    %v965 = vpop.f32.mrf.mxu0
    %v966 = vadd.f32 %v953, %v965
    %v967 = vpop.f32.mrf.mxu0
    %968 = vdwg.mxu0
    %969 = vmatpush.bf16.msra.mxu0 %v527
    %970 = vmatpush.bf16.msra.mxu0 %v526
    %971 = vmatpush.bf16.msra.mxu0 %v525
    %972 = vmatpush.bf16.msra.mxu0 %v524
    %973 = vmatpush.bf16.msra.mxu0 %v523
    %974 = vmatpush.bf16.msra.mxu0 %v522
    %975 = vmatpush.bf16.msra.mxu0 %v521
    %976 = vmatpush.bf16.msra.mxu0 %v520
    %977 = vmatmul.bf16.gmra.mxu0 %v889
    %v978 = vpop.f32.mrf.mxu0
    %v979 = vadd.f32 %v966, %v978
    %v980 = vpop.f32.mrf.mxu0
    %981 = vdwg.mxu0
    %982 = vmatpush.bf16.msra.mxu0 %v535
    %983 = vmatpush.bf16.msra.mxu0 %v534
    %984 = vmatpush.bf16.msra.mxu0 %v533
    %985 = vmatpush.bf16.msra.mxu0 %v532
    %986 = vmatpush.bf16.msra.mxu0 %v531
    %987 = vmatpush.bf16.msra.mxu0 %v530
    %988 = vmatpush.bf16.msra.mxu0 %v529
    %989 = vmatpush.bf16.msra.mxu0 %v528
    %990 = vmatmul.bf16.gmra.mxu0 %v890
    %v991 = vpop.f32.mrf.mxu0
    %v992 = vadd.f32 %v979, %v991
    %v993 = vpop.f32.mrf.mxu0
    %994 = vdwg.mxu0
    %v995 = vpack.c.bf16 %v992, %v992
    %996 = vmatpush.bf16.msra.mxu0 %v747
    %997 = vmatpush.bf16.msra.mxu0 %v746
    %998 = vmatpush.bf16.msra.mxu0 %v745
    %999 = vmatpush.bf16.msra.mxu0 %v744
    %1000 = vmatpush.bf16.msra.mxu0 %v743
    %1001 = vmatpush.bf16.msra.mxu0 %v742
    %1002 = vmatpush.bf16.msra.mxu0 %v741
    %1003 = vmatpush.bf16.msra.mxu0 %v740
    %1004 = vmatmul.bf16.gmra.mxu0 %v995
    %v1005 = vpop.f32.mrf.mxu0
    %v1006 = vadd.f32 %v706, %v1005
    %v1007 = vpop.f32.mrf.mxu0
    %1008 = vdwg.mxu0
    %v1009 = vrot.slane %v1006, 4
    %v1010 = vadd.f32 %v1006, %v1009
    %v1011 = vrot.slane %v1010, 2
    %v1012 = vadd.f32 %v1010, %v1011
    %v1013 = vrot.slane %v1012, 1
    %v1014 = vadd.f32 %v1012, %v1013
    %v1015 = vmul.f32 %v1014, %v781
    %v1016 = vsub.f32 %v1006, %v1015
    %v1017 = vmul.f32 %v1016, %v1016
    %v1018 = vrot.slane %v1017, 4
    %v1019 = vadd.f32 %v1017, %v1018
    %v1020 = vrot.slane %v1019, 2
    %v1021 = vadd.f32 %v1019, %v1020
    %v1022 = vrot.slane %v1021, 1
    %v1023 = vadd.f32 %v1021, %v1022
    %v1024 = vmul.f32 %v1023, %v781
    %v1025 = vadd.f32 %v1024, 1e-05
    %v1026 = vrsqrt.pop %v1025
    %v1027 = vmul.f32 %v1026, %v1025
    %v1028 = vmul.f32 %v1027, %v1026
    %v1029 = vmul.f32 0.5, %v1028
    %v1030 = vsub.f32 1.5, %v1029
    %v1031 = vmul.f32 %v1026, %v1030
    %vm1032 = vweird.f32 %v1025
    %vm1033 = vweird.f32 %v1026
    %vm1034 = vmor %vm1032, %vm1033
    %v1035 = vsel %vm1034, %v1026, %v1031
    %v1036 = vmul.f32 %v1016, %v1035
    %v1037 = vmul.f32 %v1036, %v805
    %v1038 = vadd.f32 %v1037, %v809
    %v1039 = vmax.f32 %v1038, 0.0
    %v1040 = vpack.c.bf16 %v1039, %v1039
    %1041 = vmatpush.bf16.msra.mxu0 %v853
    %1042 = vmatpush.bf16.msra.mxu0 %v852
    %1043 = vmatpush.bf16.msra.mxu0 %v851
    %1044 = vmatpush.bf16.msra.mxu0 %v850
    %1045 = vmatpush.bf16.msra.mxu0 %v849
    %1046 = vmatpush.bf16.msra.mxu0 %v848
    %1047 = vmatpush.bf16.msra.mxu0 %v847
    %1048 = vmatpush.bf16.msra.mxu0 %v846
    %1049 = vmatmul.bf16.gmra.mxu0 %v1040
    %v1050 = vpop.f32.mrf.mxu0
    %v1051 = vadd.f32 0.0, %v1050
    %v1052 = vpop.f32.mrf.mxu0
    %1053 = vdwg.mxu0
    %v1054 = vsub.f32 %v872, %v1051
    %v1055 = vmul.f32 %v1054, %v1054
    %1056 = vadd.xlane.f32.xlu0 %v1055
    %v1057 = vpop.xlane.xlu0 %1056
    %v1058 = vrot.slane %v1057, 4
    %v1059 = vadd.f32 %v1057, %v1058
    %v1060 = vrot.slane %v1059, 2
    %v1061 = vadd.f32 %v1059, %v1060
    %v1062 = vrot.slane %v1061, 1
    %v1063 = vadd.f32 %v1061, %v1062
    %s1064 = vtos %v1063
    %v1065 = vrcp.pop 1024.0
    %v1066 = vmul.f32 1024.0, %v1065
    %v1067 = vsub.f32 1.0, %v1066
    %v1068 = vmul.f32 %v1065, %v1067
    %v1069 = vadd.f32 %v1065, %v1068
    %vm1070 = vweird.f32 %v1065
    %v1071 = vsel %vm1070, %v1065, %v1069
    %s1072 = vtos %v1071
    %s1073 = smul.f32 %s1064, %s1072
    %v1074 = vrot.slane %v872, 4
    %v1075 = vadd.f32 %v872, %v1074
    %v1076 = vrot.slane %v1075, 2
    %v1077 = vadd.f32 %v1075, %v1076
    %v1078 = vrot.slane %v1077, 1
    %v1079 = vadd.f32 %v1077, %v1078
    %v1080 = vmul.f32 %v1079, %v781
    %v1081 = vsub.f32 %v872, %v1080
    %v1082 = vmul.f32 %v1081, %v1081
    %v1083 = vrot.slane %v1082, 4
    %v1084 = vadd.f32 %v1082, %v1083
    %v1085 = vrot.slane %v1084, 2
    %v1086 = vadd.f32 %v1084, %v1085
    %v1087 = vrot.slane %v1086, 1
    %v1088 = vadd.f32 %v1086, %v1087
    %v1089 = vmul.f32 %v1088, 0.14285715
    %v1090 = vadd.f32 %v1089, 0.0001
    %v1091 = vrsqrt.pop %v1090
    %v1092 = vmul.f32 %v1091, %v1090
    %v1093 = vmul.f32 %v1092, %v1091
    %v1094 = vmul.f32 0.5, %v1093
    %v1095 = vsub.f32 1.5, %v1094
    %v1096 = vmul.f32 %v1091, %v1095
    %v1097 = vmul.f32 %v1090, %v1096
    %vm1098 = vcmp.eq.f32.partialorder %v1090, inf
    %v1099 = vsel %vm1098, %v1090, %v1097
    %vm1100 = vcmp.eq.f32.partialorder %v1090, 0.0
    %v1101 = vand.u32 %v1090, 2147483648
    %v1102 = vsel %vm1100, %v1101, %v1099
    %v1103 = vsub.f32 1.0, %v1102
    %v1104 = vmax.f32 %v1103, 0.0
    %vm1105 = vcmask 1040384
    %v1106 = vsel %vm1105, %v1104, 0.0
    %1107 = vadd.xlane.f32.xlu0 %v1106
    %v1108 = vpop.xlane.xlu0 %1107
    %v1109 = vrot.slane %v1108, 4
    %v1110 = vadd.f32 %v1108, %v1109
    %v1111 = vrot.slane %v1110, 2
    %v1112 = vadd.f32 %v1110, %v1111
    %v1113 = vrot.slane %v1112, 1
    %v1114 = vadd.f32 %v1112, %v1113
    %s1115 = vtos %v1114
    %v1116 = vrcp.pop 128.0
    %v1117 = vmul.f32 128.0, %v1116
    %v1118 = vsub.f32 1.0, %v1117
    %v1119 = vmul.f32 %v1116, %v1118
    %v1120 = vadd.f32 %v1116, %v1119
    %vm1121 = vweird.f32 %v1116
    %v1122 = vsel %vm1121, %v1116, %v1120
    %s1123 = vtos %v1122
    %s1124 = smul.f32 %s1115, %s1123
    %1125 = vmatpush.xpose.msra.mxu0 0.0
    %1126 = vmatpush.xpose.msra.mxu0 0.0
    %1127 = vmatpush.xpose.msra.mxu0 0.0
    %1128 = vmatpush.xpose.msra.mxu0 0.0
    %1129 = vmatpush.xpose.msra.mxu0 0.0
    %1130 = vmatpush.xpose.msra.mxu0 0.0
    %1131 = vmatpush.xpose.msra.mxu0 0.0
    %1132 = vmatpush.xpose.msra.mxu0 0.0
    %1133 = vmatpush.xpose.msra.mxu0 0.0
    %1134 = vmatpush.xpose.msra.mxu0 0.0
    %1135 = vmatpush.xpose.msra.mxu0 0.0
    %1136 = vmatpush.xpose.msra.mxu0 0.0
    %1137 = vmatpush.xpose.msra.mxu0 0.0
    %1138 = vmatpush.xpose.msra.mxu0 0.0
    %1139 = vmatpush.xpose.msra.mxu0 0.0
    %1140 = vmatpush.xpose.msra.mxu0 %v1081
    %1141 = vmatmul.f32.gmra.mxu0 %v1081
    %v1142 = vpop.f32.mrf.mxu0
    %v1143 = vadd.f32 0.0, %v1142
    %1144 = vdwg.mxu0
    %v1145 = vmul.f32 %v1143, %v1143
    %vm1146 = vcmask 64512
    %v1147 = vsel %vm1146, %v1145, 0.0
    %1148 = vadd.xlane.f32.xlu0 %v1147
    %v1149 = vpop.xlane.xlu0 %1148
    %v1150 = vrot.slane %v1149, 4
    %v1151 = vadd.f32 %v1149, %v1150
    %v1152 = vrot.slane %v1151, 2
    %v1153 = vadd.f32 %v1151, %v1152
    %v1154 = vrot.slane %v1153, 1
    %v1155 = vadd.f32 %v1153, %v1154
    %s1156 = vtos %v1155
    %s1157 = smul.f32 %s1156, 0.020408163
    %v1158 = vmul.f32 %v1089, %v1089
    %v1159 = vsel %vm1105, %v1158, 0.0
    %1160 = vadd.xlane.f32.xlu0 %v1159
    %v1161 = vpop.xlane.xlu0 %1160
    %v1162 = vrot.slane %v1161, 4
    %v1163 = vadd.f32 %v1161, %v1162
    %v1164 = vrot.slane %v1163, 2
    %v1165 = vadd.f32 %v1163, %v1164
    %v1166 = vrot.slane %v1165, 1
    %v1167 = vadd.f32 %v1165, %v1166
    %s1168 = vtos %v1167
    %s1169 = ssub.f32 %s1157, %s1168
    %v1170 = vrcp.pop 128.0
    %v1171 = vmul.f32 128.0, %v1170
    %v1172 = vsub.f32 1.0, %v1171
    %v1173 = vmul.f32 %v1170, %v1172
    %v1174 = vadd.f32 %v1170, %v1173
    %vm1175 = vweird.f32 %v1170
    %v1176 = vsel %vm1175, %v1170, %v1174
    %s1177 = vtos %v1176
    %s1178 = smul.f32 %s1169, %s1177
    %v1179 = vrot.slane %v1051, 4
    %v1180 = vadd.f32 %v1051, %v1179
    %v1181 = vrot.slane %v1180, 2
    %v1182 = vadd.f32 %v1180, %v1181
    %v1183 = vrot.slane %v1182, 1
    %v1184 = vadd.f32 %v1182, %v1183
    %v1185 = vmul.f32 %v1184, %v781
    %v1186 = vsub.f32 %v1051, %v1185
    %v1187 = vmul.f32 %v1186, %v1186
    %v1188 = vrot.slane %v1187, 4
    %v1189 = vadd.f32 %v1187, %v1188
    %v1190 = vrot.slane %v1189, 2
    %v1191 = vadd.f32 %v1189, %v1190
    %v1192 = vrot.slane %v1191, 1
    %v1193 = vadd.f32 %v1191, %v1192
    %v1194 = vmul.f32 %v1193, 0.14285715
    %v1195 = vadd.f32 %v1194, 0.0001
    %v1196 = vrsqrt.pop %v1195
    %v1197 = vmul.f32 %v1196, %v1195
    %v1198 = vmul.f32 %v1197, %v1196
    %v1199 = vmul.f32 0.5, %v1198
    %v1200 = vsub.f32 1.5, %v1199
    %v1201 = vmul.f32 %v1196, %v1200
    %v1202 = vmul.f32 %v1195, %v1201
    %vm1203 = vcmp.eq.f32.partialorder %v1195, inf
    %v1204 = vsel %vm1203, %v1195, %v1202
    %vm1205 = vcmp.eq.f32.partialorder %v1195, 0.0
    %v1206 = vand.u32 %v1195, 2147483648
    %v1207 = vsel %vm1205, %v1206, %v1204
    %v1208 = vsub.f32 1.0, %v1207
    %v1209 = vmax.f32 %v1208, 0.0
    %v1210 = vsel %vm1105, %v1209, 0.0
    %1211 = vadd.xlane.f32.xlu0 %v1210
    %v1212 = vpop.xlane.xlu0 %1211
    %v1213 = vrot.slane %v1212, 4
    %v1214 = vadd.f32 %v1212, %v1213
    %v1215 = vrot.slane %v1214, 2
    %v1216 = vadd.f32 %v1214, %v1215
    %v1217 = vrot.slane %v1216, 1
    %v1218 = vadd.f32 %v1216, %v1217
    %s1219 = vtos %v1218
    %v1220 = vrcp.pop 128.0
    %v1221 = vmul.f32 128.0, %v1220
    %v1222 = vsub.f32 1.0, %v1221
    %v1223 = vmul.f32 %v1220, %v1222
    %v1224 = vadd.f32 %v1220, %v1223
    %vm1225 = vweird.f32 %v1220
    %v1226 = vsel %vm1225, %v1220, %v1224
    %s1227 = vtos %v1226
    %s1228 = smul.f32 %s1219, %s1227
    %1229 = vmatpush.xpose.msra.mxu0 0.0
    %1230 = vmatpush.xpose.msra.mxu0 0.0
    %1231 = vmatpush.xpose.msra.mxu0 0.0
    %1232 = vmatpush.xpose.msra.mxu0 0.0
    %1233 = vmatpush.xpose.msra.mxu0 0.0
    %1234 = vmatpush.xpose.msra.mxu0 0.0
    %1235 = vmatpush.xpose.msra.mxu0 0.0
    %1236 = vmatpush.xpose.msra.mxu0 0.0
    %1237 = vmatpush.xpose.msra.mxu0 0.0
    %1238 = vmatpush.xpose.msra.mxu0 0.0
    %1239 = vmatpush.xpose.msra.mxu0 0.0
    %1240 = vmatpush.xpose.msra.mxu0 0.0
    %1241 = vmatpush.xpose.msra.mxu0 0.0
    %1242 = vmatpush.xpose.msra.mxu0 0.0
    %1243 = vmatpush.xpose.msra.mxu0 0.0
    %1244 = vmatpush.xpose.msra.mxu0 %v1186
    %1245 = vmatmul.f32.gmra.mxu0 %v1186
    %v1246 = vpop.f32.mrf.mxu0
    %v1247 = vadd.f32 0.0, %v1246
    %1248 = vdwg.mxu0
    %v1249 = vmul.f32 %v1247, %v1247
    %v1250 = vsel %vm1146, %v1249, 0.0
    %1251 = vadd.xlane.f32.xlu0 %v1250
    %v1252 = vpop.xlane.xlu0 %1251
    %v1253 = vrot.slane %v1252, 4
    %v1254 = vadd.f32 %v1252, %v1253
    %v1255 = vrot.slane %v1254, 2
    %v1256 = vadd.f32 %v1254, %v1255
    %v1257 = vrot.slane %v1256, 1
    %v1258 = vadd.f32 %v1256, %v1257
    %s1259 = vtos %v1258
    %s1260 = smul.f32 %s1259, 0.020408163
    %v1261 = vmul.f32 %v1194, %v1194
    %v1262 = vsel %vm1105, %v1261, 0.0
    %1263 = vadd.xlane.f32.xlu0 %v1262
    %v1264 = vpop.xlane.xlu0 %1263
    %v1265 = vrot.slane %v1264, 4
    %v1266 = vadd.f32 %v1264, %v1265
    %v1267 = vrot.slane %v1266, 2
    %v1268 = vadd.f32 %v1266, %v1267
    %v1269 = vrot.slane %v1268, 1
    %v1270 = vadd.f32 %v1268, %v1269
    %s1271 = vtos %v1270
    %s1272 = ssub.f32 %s1260, %s1271
    %v1273 = vrcp.pop 128.0
    %v1274 = vmul.f32 128.0, %v1273
    %v1275 = vsub.f32 1.0, %v1274
    %v1276 = vmul.f32 %v1273, %v1275
    %v1277 = vadd.f32 %v1273, %v1276
    %vm1278 = vweird.f32 %v1273
    %v1279 = vsel %vm1278, %v1273, %v1277
    %s1280 = vtos %v1279
    %s1281 = smul.f32 %s1272, %s1280
    %s1282 = smul.f32 %s1124, 0.5
    %s1283 = smul.f32 %s1228, 0.5
    %s1284 = sadd.f32 %s1282, %s1283
    %s1285 = sadd.f32 %s1178, %s1281
    %s1286 = smul.f32 %s1073, 25.0
    %s1287 = smul.f32 %s1284, 25.0
    %s1288 = sadd.f32 %s1286, %s1287
    %s1289 = sadd.f32 %s1288, %s1285
    %s1290 = scalar_lea.smem [#allocation2], 0
    %1291 = sst [smem:[%s1290]] %s1289
    // Predicated region
    $region38: #{vicreg_forward.1} parent=1 // pred_check
      _
    $region39: #{vicreg_forward.1} parent=1 // pred_check_branch
      %1293 = sbr.rel (0) target = $region41
    $region40: #{vicreg_forward.1} parent=1 // pred_region
      %1295 = vsyncadd [#allocation3], 0
      %s1297 = sshll.u32 %s9, 4
      %s1298 = int_to_ptr.hbm [resolvable:$true] %s1297
      %1300 = dma.smem_to_hbm [#allocation2], 16, %s1298, [#allocation3]
    $region41: #{vicreg_forward.1} parent=1 // pred_fallthru
      _
    // Predicated region
    $region42: #{vicreg_forward.1} parent=1 // pred_check
      _
    $region43: #{vicreg_forward.1} parent=1 // pred_check_branch
      %1302 = sbr.rel (0) target = $region45
    $region44: #{vicreg_forward.1} parent=1 // pred_region
      %1304 = dma.done [#allocation3], 16
    $region45: #{vicreg_forward.1} parent=1 // pred_fallthru
      _
    %1305 = sfence
    %1306 = vsyncpa [#allocation3], 1

</llo_original>
